<compile_context>
chip_gen: v6e
topology: v6e:2x2x1
jax: 0.10.0
libtpu: 0.0.40
codegen_flags: <defaults>
</compile_context>

<pallas_src>
import math

import jax
import jax.numpy as jnp
from jax.experimental import pallas as pl
from jax.experimental.pallas import tpu as pltpu


def _rope_cache_kernel(inv_freq4_ref, phase_ref, out_ref):
    # inv_freq4_ref : (1, 2*dim)  = [inv_freq | inv_freq | inv_freq | inv_freq]
    # phase_ref     : (1, 2*dim)  = [0]*dim ++ [-pi/2]*dim
    # out_ref       : (tile, 2*dim) fused cache rows: [cos(emb) | sin(emb)]
    tile = out_ref.shape[0]
    i = pl.program_id(0)

    # Positions for this tile as a (tile, 1) int32 column; one convert, then
    # broadcast against the (1, 2*dim) rows.
    pos = jax.lax.broadcasted_iota(jnp.int32, (tile, 1), 0) + i * tile
    pos = pos.astype(jnp.float32)

    # emb = outer(t, inv_freq) replicated to full lane width, with a -pi/2
    # phase on the sin half (cos(x - pi/2) == sin(x)).  One fully packed
    # transcendental per output vreg; no concat / cross-lane relayout.
    emb = pos * inv_freq4_ref[...] + phase_ref[...]        # (tile, 2*dim) f32
    out_ref[...] = jnp.cos(emb).astype(out_ref.dtype)


def _choose_tile(seq_len, dim, out_bytes):
    """Sequence rows per grid step.

    Budget: ~16 MiB of double-buffered fused output (fits comfortably inside
    scoped VMEM on every generation, incl. v7x's 32 MiB scoped / 64 MiB
    physical).  For long sequences we force >= 2 grid steps so v7x's second
    TensorCore gets work via the "parallel" grid axis.
    """
    row_bytes = 2 * dim * out_bytes
    budget = 16 * 1024 * 1024
    align = 16 if out_bytes < 4 else 8          # bf16 sublane packing
    cap = max(align, budget // (2 * row_bytes))
    cap -= cap % align

    if seq_len >= 1024:
        half = (seq_len + 1) // 2
        half = ((half + align - 1) // align) * align
        cap = min(cap, half)
        return min(cap, ((seq_len + align - 1) // align) * align)
    if seq_len <= cap:
        return seq_len                           # single block for short caches
    return cap


def deepseek_v2_rotary_embedding(seq_len, dim, base=10000.0, dtype=jnp.float32,
                                 tile=None, return_fused=False):
    """cos/sin cache equivalent to DeepseekV2RotaryEmbedding(dim).forward(x, seq_len).

    Returns (cos, sin), each (seq_len, dim) in `dtype`.  With
    return_fused=True returns the single lane-dense (seq_len, 2*dim) buffer
    (cos in lanes [0:dim), sin in [dim:2*dim)) so consumers can avoid the
    extra HBM slice passes of splitting it apart.
    """
    assert dim % 2 == 0

    # __init__-time parameter setup (tiny, plain JAX glue).
    inv_freq = 1.0 / (base ** (jnp.arange(0, dim, 2, dtype=jnp.float32) / dim))
    inv_freq4 = jnp.tile(inv_freq, 4).reshape(1, 2 * dim)            # (1, 2*dim)
    phase = jnp.concatenate(
        [jnp.zeros((dim,), jnp.float32),
         jnp.full((dim,), -0.5 * math.pi, jnp.float32)]).reshape(1, 2 * dim)

    out_bytes = jnp.dtype(dtype).itemsize
    if tile is None:
        tile = _choose_tile(seq_len, dim, out_bytes)
    tile = int(min(tile, seq_len))

    grid = (pl.cdiv(seq_len, tile),)             # ragged last block is fine

    fused = pl.pallas_call(
        _rope_cache_kernel,
        out_shape=jax.ShapeDtypeStruct((seq_len, 2 * dim), dtype),
        grid_spec=pl.GridSpec(
            grid=grid,
            in_specs=[
                # tiny constant tables, same block every step (fetched once)
                pl.BlockSpec((1, 2 * dim), lambda i: (0, 0)),
                pl.BlockSpec((1, 2 * dim), lambda i: (0, 0)),
            ],
            # fused lane-dense output: last dim 2*dim (= 128 lanes at dim=64)
            out_specs=pl.BlockSpec((tile, 2 * dim), lambda i: (i, 0)),
        ),
        compiler_params=pltpu.CompilerParams(
            # lets v7x shard sequence tiles across both TensorCores;
            # harmless no-op on single-TC v5e/v6e.
            dimension_semantics=("parallel",),
            vmem_limit_bytes=32 * 1024 * 1024,
        ),
    )(inv_freq4, phase)

    if return_fused:
        return fused
    # Module-compatible (cos, sin) API.  Under jit these slices typically fuse
    # into the consumer; traffic-sensitive callers should use return_fused=True.
    return fused[:, :dim], fused[:, dim:]


if __name__ == "__main__":
    # Small shapes consistent with the module: dim=64, seq_len=128.
    dim = 64
    seq_len = 128
    base = 10000.0

    # x is only used for device/dtype dispatch in the original module; build a
    # deterministic dummy input anyway to mirror the forward signature.
    key = jax.random.PRNGKey(0)
    x = jax.random.normal(key, (2, seq_len, dim), dtype=jnp.float32)  # unused math-wise

    cos, sin = deepseek_v2_rotary_embedding(seq_len, dim, base=base)
    cos = jax.block_until_ready(cos)
    sin = jax.block_until_ready(sin)

    # Reference check (pure JAX) to validate semantics.
    inv_freq_ref = 1.0 / (base ** (jnp.arange(0, dim, 2, dtype=jnp.float32) / dim))
    t = jnp.arange(seq_len, dtype=jnp.float32)
    freqs = jnp.outer(t, inv_freq_ref)
    emb = jnp.concatenate([freqs, freqs], axis=-1)
    assert cos.shape == (seq_len, dim) and sin.shape == (seq_len, dim)
    # sin half uses cos(x - pi/2); f32 pi/2 rounding error <= ~6e-8 in the
    # angle, far inside the tolerance.
    assert jnp.allclose(cos, jnp.cos(emb), atol=1e-5, rtol=1e-5)
    assert jnp.allclose(sin, jnp.sin(emb), atol=1e-5, rtol=1e-5)

    # Also exercise the fused (lane-dense, preferred) return path.
    fused = jax.block_until_ready(
        deepseek_v2_rotary_embedding(seq_len, dim, base=base, return_fused=True))
    assert fused.shape == (seq_len, 2 * dim)
    assert jnp.allclose(fused[:, :dim], jnp.cos(emb), atol=1e-5, rtol=1e-5)

    # TODO(synk): the module's dynamic cache growth when seq_len > max_seq_len_cached
    # is host-side Python control flow; call this wrapper with the larger seq_len instead.

    print("KERNEL_OK")
</pallas_src>

<mosaic_0001>
module attributes {stable_mosaic.version = 11 : i64} {
  func.func @_rope_cache_kernel(%arg0: i32, %arg1: memref<1x128xf32, #tpu.memory_space<vmem>>, %arg2: memref<1x128xf32, #tpu.memory_space<vmem>>, %arg3: memref<128x128xf32, #tpu.memory_space<vmem>>) attributes {dimension_semantics = [#tpu.dimension_semantics<parallel>], iteration_bounds = array<i64: 1>, scalar_prefetch = 0 : i64, scratch_operands = 0 : i64, tpu.core_type = #tpu.core_type<tc>, window_params = [{pipeline_mode = #tpu.pipeline_mode<synchronous>, transform_indices = @transform_0, window_bounds = array<i64: 1, 128>}, {pipeline_mode = #tpu.pipeline_mode<synchronous>, transform_indices = @transform_1, window_bounds = array<i64: 1, 128>}, {transform_indices = @transform_2, window_bounds = array<i64: 128, 128>}]} {
    %0 = tpu.iota {dimensions = array<i32: 0>} : vector<128x1xi32>
    %c128_i32 = arith.constant 128 : i32
    %1 = arith.muli %arg0, %c128_i32 : i32
    %2 = vector.broadcast %1 : i32 to vector<128x1xi32>
    %3 = arith.addi %0, %2 : vector<128x1xi32>
    %4 = arith.sitofp %3 : vector<128x1xi32> to vector<128x1xf32>
    %c0 = arith.constant 0 : index
    %c0_0 = arith.constant 0 : index
    %5 = vector.load %arg1[%c0, %c0_0] : memref<1x128xf32, #tpu.memory_space<vmem>>, vector<1x128xf32>
    %6 = vector.broadcast %4 : vector<128x1xf32> to vector<128x128xf32>
    %7 = vector.broadcast %5 : vector<1x128xf32> to vector<128x128xf32>
    %8 = arith.mulf %6, %7 : vector<128x128xf32>
    %c0_1 = arith.constant 0 : index
    %c0_2 = arith.constant 0 : index
    %9 = vector.load %arg2[%c0_1, %c0_2] : memref<1x128xf32, #tpu.memory_space<vmem>>, vector<1x128xf32>
    %10 = vector.broadcast %9 : vector<1x128xf32> to vector<128x128xf32>
    %11 = arith.addf %8, %10 : vector<128x128xf32>
    %12 = math.cos %11 : vector<128x128xf32>
    %c0_3 = arith.constant 0 : index
    %c0_4 = arith.constant 0 : index
    %13 = vector.load %arg3[%c0_3, %c0_4] : memref<128x128xf32, #tpu.memory_space<vmem>>, vector<128x128xf32>
    tpu.vector_store %arg3[%c0_3, %c0_4], %12 {strides = array<i32>} : memref<128x128xf32, #tpu.memory_space<vmem>>, vector<128x128xf32>,
    return
  }
  func.func @transform_0(%arg0: i32) -> (i32, i32) {
    %c0_i32 = arith.constant 0 : i32
    %c0_i32_0 = arith.constant 0 : i32
    %c0_i32_1 = arith.constant 0 : i32
    return %c0_i32, %c0_i32_0 : i32, i32
  }
  func.func @transform_1(%arg0: i32) -> (i32, i32) {
    %c0_i32 = arith.constant 0 : i32
    %c0_i32_0 = arith.constant 0 : i32
    %c0_i32_1 = arith.constant 0 : i32
    return %c0_i32, %c0_i32_0 : i32, i32
  }
  func.func @transform_2(%arg0: i32) -> (i32, i32) {
    %c0_i32 = arith.constant 0 : i32
    %c0_i32_0 = arith.constant 0 : i32
    return %arg0, %c0_i32 : i32, i32
  }
}

</mosaic_0001>

<llo_original>
// kernel: tpu_custom_call.1
$region0: #{tpu_custom_call.1}
  #allocation0 [shape = 'u32[]', space=smem, size = 0x4, offset = 0x4, fixed_abs, tag = 'smem constant byte address 0x4 - core index']
  #allocation1 [shape = 'u32[144,128]{1,0:T(1,128)}', space=vmem, size = 0x12000, scoped, tag = 'internal scratch']
  %s0 = inlined_call_operand.hbm [shape: f32[1,128], index: 0, kind: input, shape index: {}]
  %s1 = inlined_call_operand.vmem [shape: f32[1,128], index: 1, kind: input, shape index: {}]
  %s2 = inlined_call_operand.hbm [shape: f32[128,128], index: 2, kind: output, shape index: {}]
  %s3 = sld [smem:[#allocation0]]
  $region22: #{tpu_custom_call.1} parent=0
    _
  %s5 = ssub.s32 1, %s3
  %s6 = scalar_select 0, %s5, %s3
  $region1: #{tpu_custom_call.1} parent=0
    #allocation2 [shape = 'u8[512]{0}', space=vmem, size = 0x400, scoped, tag = 'input window, operand 0, single buffered']
    #allocation3 [shape = 's32[1]{0}', space=sflag, size = 0x4, scoped, tag = 'scoped memory for tpu_custom_call.1']
    #allocation4 [shape = 's32[1]{0}', space=sflag, size = 0x4, scoped, tag = 'scoped memory for tpu_custom_call.1']
    #allocation5 [shape = 'u8[65536]{0}', space=vmem, size = 0x10000, scoped, tag = 'output window, operand 0, single buffered']
    %7 = vsyncpa [#allocation3], 0
    %8 = vsyncpa [#allocation4], 0
    // Predicated region
    $region2: #{tpu_custom_call.1} parent=1 // pred_check
      _
    $region3: #{tpu_custom_call.1} parent=1 // pred_check_branch
      %10 = sbr.rel (0) target = $region5
    $region4: #{tpu_custom_call.1} parent=1 // pred_region
      %s12 = ssub.s32 16, 16
      %13 = vsyncadd [#allocation3], %s12
      %s15 = sshll.u32 [#allocation2], 4
      %s16 = int_to_ptr.vmem [resolvable:$true] %s15
      %18 = dma.hbm_to_vmem [thread:$0]  %s0, 16, %s16, [#allocation3]
    $region5: #{tpu_custom_call.1} parent=1 // pred_fallthru
      _
    // Predicated region
    $region6: #{tpu_custom_call.1} parent=1 // pred_check
      _
    $region7: #{tpu_custom_call.1} parent=1 // pred_check_branch
      %20 = sbr.rel (0) target = $region9
    $region8: #{tpu_custom_call.1} parent=1 // pred_region
      _
    $region9: #{tpu_custom_call.1} parent=1 // pred_fallthru
      _
    // Predicated region
    $region10: #{tpu_custom_call.1} parent=1 // pred_check
      _
    $region11: #{tpu_custom_call.1} parent=1 // pred_check_branch
      %22 = sbr.rel (0) target = $region13
    $region12: #{tpu_custom_call.1} parent=1 // pred_region
      %23 = dma.done [#allocation3], 16
    $region13: #{tpu_custom_call.1} parent=1 // pred_fallthru
      _
    %v24 = vlaneseq
    %v25 = vshrl.u32 %v24, 7
    %v26 = vadd.s32 %v25, 8
    %v27 = vadd.s32 %v25, 16
    %v28 = vadd.s32 %v25, 24
    %v29 = vadd.s32 %v25, 32
    %v30 = vadd.s32 %v25, 40
    %v31 = vadd.s32 %v25, 48
    %v32 = vadd.s32 %v25, 56
    %v33 = vadd.s32 %v25, 64
    %v34 = vadd.s32 %v25, 72
    %v35 = vadd.s32 %v25, 80
    %v36 = vadd.s32 %v25, 88
    %v37 = vadd.s32 %v25, 96
    %v38 = vadd.s32 %v25, 104
    %v39 = vadd.s32 %v25, 112
    %v40 = vadd.s32 %v25, 120
    %s41 = smul.u32 0, 128
    %v42 = vstv %s41
    %v43 = vadd.s32 %v25, %v42
    %v44 = vadd.s32 %v26, %v42
    %v45 = vadd.s32 %v27, %v42
    %v46 = vadd.s32 %v28, %v42
    %v47 = vadd.s32 %v29, %v42
    %v48 = vadd.s32 %v30, %v42
    %v49 = vadd.s32 %v31, %v42
    %v50 = vadd.s32 %v32, %v42
    %v51 = vadd.s32 %v33, %v42
    %v52 = vadd.s32 %v34, %v42
    %v53 = vadd.s32 %v35, %v42
    %v54 = vadd.s32 %v36, %v42
    %v55 = vadd.s32 %v37, %v42
    %v56 = vadd.s32 %v38, %v42
    %v57 = vadd.s32 %v39, %v42
    %v58 = vadd.s32 %v40, %v42
    %v59 = vcvt.s32.f32 %v43
    %v60 = vcvt.s32.f32 %v44
    %v61 = vcvt.s32.f32 %v45
    %v62 = vcvt.s32.f32 %v46
    %v63 = vcvt.s32.f32 %v47
    %v64 = vcvt.s32.f32 %v48
    %v65 = vcvt.s32.f32 %v49
    %v66 = vcvt.s32.f32 %v50
    %v67 = vcvt.s32.f32 %v51
    %v68 = vcvt.s32.f32 %v52
    %v69 = vcvt.s32.f32 %v53
    %v70 = vcvt.s32.f32 %v54
    %v71 = vcvt.s32.f32 %v55
    %v72 = vcvt.s32.f32 %v56
    %v73 = vcvt.s32.f32 %v57
    %v74 = vcvt.s32.f32 %v58
    %v75 = vld [vmem:[#allocation2] sm:$0x1]
    %v77 = vlaneseq
    %v78 = vshrl.u32 %v77, 7
    %v79 = vsub.s32 0, %v78
    %v80 = vrot.slane %v75, %v79
    %v82 = vmul.f32 %v59, %v80
    %v83 = vmul.f32 %v60, %v80
    %v84 = vmul.f32 %v61, %v80
    %v85 = vmul.f32 %v62, %v80
    %v86 = vmul.f32 %v63, %v80
    %v87 = vmul.f32 %v64, %v80
    %v88 = vmul.f32 %v65, %v80
    %v89 = vmul.f32 %v66, %v80
    %v90 = vmul.f32 %v67, %v80
    %v91 = vmul.f32 %v68, %v80
    %v92 = vmul.f32 %v69, %v80
    %v93 = vmul.f32 %v70, %v80
    %v94 = vmul.f32 %v71, %v80
    %v95 = vmul.f32 %v72, %v80
    %v96 = vmul.f32 %v73, %v80
    %v97 = vmul.f32 %v74, %v80
    %v98 = vld [vmem:[%s1] sm:$0x1]
    %v100 = vlaneseq
    %v101 = vshrl.u32 %v100, 7
    %v102 = vsub.s32 0, %v101
    %v103 = vrot.slane %v98, %v102
    %v105 = vadd.f32 %v82, %v103
    %v106 = vadd.f32 %v83, %v103
    %v107 = vadd.f32 %v84, %v103
    %v108 = vadd.f32 %v85, %v103
    %v109 = vadd.f32 %v86, %v103
    %v110 = vadd.f32 %v87, %v103
    %v111 = vadd.f32 %v88, %v103
    %v112 = vadd.f32 %v89, %v103
    %v113 = vadd.f32 %v90, %v103
    %v114 = vadd.f32 %v91, %v103
    %v115 = vadd.f32 %v92, %v103
    %v116 = vadd.f32 %v93, %v103
    %v117 = vadd.f32 %v94, %v103
    %v118 = vadd.f32 %v95, %v103
    %v119 = vadd.f32 %v96, %v103
    %v120 = vadd.f32 %v97, %v103
    %v121 = vand.u32 2147483647, %v105
    %vm122 = vcmp.le.f32.partialorder %v121, 0.7853982
    %vm123 = vcmp.lt.s32.totalorder %v105, 0
    %v124 = vand.u32 %v105, 2139095040
    %v125 = vshrl.u32 %v124, 23
    %v126 = vsub.s32 %v125, 127
    %v127 = vand.u32 2147483647, %v105
    %v128 = vand.u32 %v127, 8388607
    %v129 = vor.u32 %v128, 8388608
    %v130 = vsub.s32 0, %v129
    %v131 = vadd.s32 %v126, 1
    %vm132 = vcmp.gt.s32.totalorder %v131, 0
    %v133 = vsel %vm132, %v131, 0
    %v134 = vshrl.u32 %v133, 5
    %v135 = vand.u32 %v133, 31
    %v136 = vsub.s32 32, %v135
    %v137 = vshrl.u32 683565275, %v136
    %v138 = vshll.u32 683565275, %v135
    %v139 = vshrl.u32 2475754826, %v136
    %v140 = vor.u32 %v138, %v139
    %v141 = vshll.u32 2475754826, %v135
    %v142 = vshrl.u32 2131351028, %v136
    %v143 = vor.u32 %v141, %v142
    %v144 = vshll.u32 2131351028, %v135
    %v145 = vshrl.u32 2102212464, %v136
    %v146 = vor.u32 %v144, %v145
    %v147 = vshll.u32 2102212464, %v135
    %v148 = vshrl.u32 920167782, %v136
    %v149 = vor.u32 %v147, %v148
    %v150 = vshll.u32 920167782, %v135
    %v151 = vshrl.u32 1326507024, %v136
    %v152 = vor.u32 %v150, %v151
    %vm153 = vcmp.lt.s32.totalorder %v134, 1
    %vm154 = vcmp.lt.s32.totalorder %v134, 2
    %vm155 = vcmp.lt.s32.totalorder %v134, 3
    %vm156 = vcmp.lt.s32.totalorder %v134, 4
    %v157 = vsel %vm153, %v137, %v140
    %v158 = vsel %vm156, %v146, 2102212464
    %v159 = vsel %vm155, %v143, %v158
    %v160 = vsel %vm154, %v157, %v159
    %v161 = vsel %vm153, %v140, %v143
    %v162 = vsel %vm156, %v149, 920167782
    %v163 = vsel %vm155, %v146, %v162
    %v164 = vsel %vm154, %v161, %v163
    %v165 = vsel %vm153, %v143, %v146
    %v166 = vsel %vm156, %v152, 1326507024
    %v167 = vsel %vm155, %v149, %v166
    %v168 = vsel %vm154, %v165, %v167
    %v169 = vshll.u32 %v129, 8
    %v170 = vmul.u32.u64.compose %v169, %v168
    %v171 = vextract.low.u32 %v170
    %v172 = vextract.high.u32 %v170
    %v173 = vmul.u32.u64.compose %v169, %v164
    %v174 = vextract.low.u32 %v173
    %v175 = vextract.high.u32 %v173
    %v176 = vmul.u32 %v169, %v160
    %v177 = vadd.s32 %v172, %v174
    %vm178 = vc.u32 %v172, %v174
    %v179 = vadd.s32 %v175, 1
    %v180 = vsel %vm178, %v179, %v175
    %v181 = vadd.s32 %v176, %v180
    %v182 = vadd.s32 %v181, 536870912
    %v183 = vshrl.u32 %v182, 30
    %v184 = vshll.u32 %v183, 30
    %v185 = vsub.s32 %v181, %v184
    %vm186 = vcmp.lt.s32.totalorder %v185, 0
    %v187 = vsub.s32 0, %v185
    %v188 = vsel %vm186, %v187, %v185
    %v189 = vclz %v188
    %v190 = vsub.s32 %v189, 2
    %vm191 = vcmp.gt.s32.totalorder 0, %v190
    %v192 = vsel %vm191, 0, %v190
    %v193 = vsub.s32 32, %v192
    %v194 = vshll.u32 %v185, %v192
    %v195 = vshrl.u32 %v177, %v193
    %v196 = vor.u32 %v194, %v195
    %v197 = vsub.s32 4294967266, %v192
    %v198 = vadd.s32 %v197, 127
    %v199 = vshll.u32 %v198, 23
    %v200 = vor.u32 4788187, %v199
    %v201 = vand.u32 2147483647, %v200
    %v203 = vcvt.s32.f32 %v196
    %v204 = vmul.f32 %v203, %v201
    %v205 = vxor.u32 %v204, 2147483648
    %v206 = vsel %vm123, %v205, %v204
    %v207 = vsub.s32 4, %v183
    %v208 = vsel %vm123, %v207, %v183
    %v209 = vsel %vm122, %v105, %v206
    %v210 = vsel %vm122, 0, %v208
    %v211 = vcosq.f32.pop %v209
    %v212 = vsinq.f32.pop %v209
    %vm213 = vweird.f32 %v105
    %v214 = vand.u32 %v210, 3
    %vm215 = vcmp.lt.s32.totalorder %v214, 2
    %vm216 = vcmp.eq.s32.totalorder %v214, 0
    %v217 = vxor.u32 %v212, 2147483648
    %v218 = vsel %vm216, %v211, %v217
    %vm219 = vcmp.eq.s32.totalorder %v214, 2
    %v220 = vxor.u32 %v211, 2147483648
    %v221 = vsel %vm219, %v220, %v212
    %v222 = vsel %vm215, %v218, %v221
    %v223 = vsel %vm213, nan, %v222
    %v224 = vand.u32 2147483647, %v106
    %vm225 = vcmp.le.f32.partialorder %v224, 0.7853982
    %vm226 = vcmp.lt.s32.totalorder %v106, 0
    %v227 = vand.u32 %v106, 2139095040
    %v228 = vshrl.u32 %v227, 23
    %v229 = vsub.s32 %v228, 127
    %v230 = vand.u32 2147483647, %v106
    %v231 = vand.u32 %v230, 8388607
    %v232 = vor.u32 %v231, 8388608
    %v233 = vsub.s32 0, %v232
    %v234 = vadd.s32 %v229, 1
    %vm235 = vcmp.gt.s32.totalorder %v234, 0
    %v236 = vsel %vm235, %v234, 0
    %v237 = vshrl.u32 %v236, 5
    %v238 = vand.u32 %v236, 31
    %v239 = vsub.s32 32, %v238
    %v240 = vshrl.u32 683565275, %v239
    %v241 = vshll.u32 683565275, %v238
    %v242 = vshrl.u32 2475754826, %v239
    %v243 = vor.u32 %v241, %v242
    %v244 = vshll.u32 2475754826, %v238
    %v245 = vshrl.u32 2131351028, %v239
    %v246 = vor.u32 %v244, %v245
    %v247 = vshll.u32 2131351028, %v238
    %v248 = vshrl.u32 2102212464, %v239
    %v249 = vor.u32 %v247, %v248
    %v250 = vshll.u32 2102212464, %v238
    %v251 = vshrl.u32 920167782, %v239
    %v252 = vor.u32 %v250, %v251
    %v253 = vshll.u32 920167782, %v238
    %v254 = vshrl.u32 1326507024, %v239
    %v255 = vor.u32 %v253, %v254
    %vm256 = vcmp.lt.s32.totalorder %v237, 1
    %vm257 = vcmp.lt.s32.totalorder %v237, 2
    %vm258 = vcmp.lt.s32.totalorder %v237, 3
    %vm259 = vcmp.lt.s32.totalorder %v237, 4
    %v260 = vsel %vm256, %v240, %v243
    %v261 = vsel %vm259, %v249, 2102212464
    %v262 = vsel %vm258, %v246, %v261
    %v263 = vsel %vm257, %v260, %v262
    %v264 = vsel %vm256, %v243, %v246
    %v265 = vsel %vm259, %v252, 920167782
    %v266 = vsel %vm258, %v249, %v265
    %v267 = vsel %vm257, %v264, %v266
    %v268 = vsel %vm256, %v246, %v249
    %v269 = vsel %vm259, %v255, 1326507024
    %v270 = vsel %vm258, %v252, %v269
    %v271 = vsel %vm257, %v268, %v270
    %v272 = vshll.u32 %v232, 8
    %v273 = vmul.u32.u64.compose %v272, %v271
    %v274 = vextract.low.u32 %v273
    %v275 = vextract.high.u32 %v273
    %v276 = vmul.u32.u64.compose %v272, %v267
    %v277 = vextract.low.u32 %v276
    %v278 = vextract.high.u32 %v276
    %v279 = vmul.u32 %v272, %v263
    %v280 = vadd.s32 %v275, %v277
    %vm281 = vc.u32 %v275, %v277
    %v282 = vadd.s32 %v278, 1
    %v283 = vsel %vm281, %v282, %v278
    %v284 = vadd.s32 %v279, %v283
    %v285 = vadd.s32 %v284, 536870912
    %v286 = vshrl.u32 %v285, 30
    %v287 = vshll.u32 %v286, 30
    %v288 = vsub.s32 %v284, %v287
    %vm289 = vcmp.lt.s32.totalorder %v288, 0
    %v290 = vsub.s32 0, %v288
    %v291 = vsel %vm289, %v290, %v288
    %v292 = vclz %v291
    %v293 = vsub.s32 %v292, 2
    %vm294 = vcmp.gt.s32.totalorder 0, %v293
    %v295 = vsel %vm294, 0, %v293
    %v296 = vsub.s32 32, %v295
    %v297 = vshll.u32 %v288, %v295
    %v298 = vshrl.u32 %v280, %v296
    %v299 = vor.u32 %v297, %v298
    %v300 = vsub.s32 4294967266, %v295
    %v301 = vadd.s32 %v300, 127
    %v302 = vshll.u32 %v301, 23
    %v303 = vor.u32 4788187, %v302
    %v304 = vand.u32 2147483647, %v303
    %v306 = vcvt.s32.f32 %v299
    %v307 = vmul.f32 %v306, %v304
    %v308 = vxor.u32 %v307, 2147483648
    %v309 = vsel %vm226, %v308, %v307
    %v310 = vsub.s32 4, %v286
    %v311 = vsel %vm226, %v310, %v286
    %v312 = vsel %vm225, %v106, %v309
    %v313 = vsel %vm225, 0, %v311
    %v314 = vcosq.f32.pop %v312
    %v315 = vsinq.f32.pop %v312
    %vm316 = vweird.f32 %v106
    %v317 = vand.u32 %v313, 3
    %vm318 = vcmp.lt.s32.totalorder %v317, 2
    %vm319 = vcmp.eq.s32.totalorder %v317, 0
    %v320 = vxor.u32 %v315, 2147483648
    %v321 = vsel %vm319, %v314, %v320
    %vm322 = vcmp.eq.s32.totalorder %v317, 2
    %v323 = vxor.u32 %v314, 2147483648
    %v324 = vsel %vm322, %v323, %v315
    %v325 = vsel %vm318, %v321, %v324
    %v326 = vsel %vm316, nan, %v325
    %v327 = vand.u32 2147483647, %v107
    %vm328 = vcmp.le.f32.partialorder %v327, 0.7853982
    %vm329 = vcmp.lt.s32.totalorder %v107, 0
    %v330 = vand.u32 %v107, 2139095040
    %v331 = vshrl.u32 %v330, 23
    %v332 = vsub.s32 %v331, 127
    %v333 = vand.u32 2147483647, %v107
    %v334 = vand.u32 %v333, 8388607
    %v335 = vor.u32 %v334, 8388608
    %v336 = vsub.s32 0, %v335
    %v337 = vadd.s32 %v332, 1
    %vm338 = vcmp.gt.s32.totalorder %v337, 0
    %v339 = vsel %vm338, %v337, 0
    %v340 = vshrl.u32 %v339, 5
    %v341 = vand.u32 %v339, 31
    %v342 = vsub.s32 32, %v341
    %v343 = vshrl.u32 683565275, %v342
    %v344 = vshll.u32 683565275, %v341
    %v345 = vshrl.u32 2475754826, %v342
    %v346 = vor.u32 %v344, %v345
    %v347 = vshll.u32 2475754826, %v341
    %v348 = vshrl.u32 2131351028, %v342
    %v349 = vor.u32 %v347, %v348
    %v350 = vshll.u32 2131351028, %v341
    %v351 = vshrl.u32 2102212464, %v342
    %v352 = vor.u32 %v350, %v351
    %v353 = vshll.u32 2102212464, %v341
    %v354 = vshrl.u32 920167782, %v342
    %v355 = vor.u32 %v353, %v354
    %v356 = vshll.u32 920167782, %v341
    %v357 = vshrl.u32 1326507024, %v342
    %v358 = vor.u32 %v356, %v357
    %vm359 = vcmp.lt.s32.totalorder %v340, 1
    %vm360 = vcmp.lt.s32.totalorder %v340, 2
    %vm361 = vcmp.lt.s32.totalorder %v340, 3
    %vm362 = vcmp.lt.s32.totalorder %v340, 4
    %v363 = vsel %vm359, %v343, %v346
    %v364 = vsel %vm362, %v352, 2102212464
    %v365 = vsel %vm361, %v349, %v364
    %v366 = vsel %vm360, %v363, %v365
    %v367 = vsel %vm359, %v346, %v349
    %v368 = vsel %vm362, %v355, 920167782
    %v369 = vsel %vm361, %v352, %v368
    %v370 = vsel %vm360, %v367, %v369
    %v371 = vsel %vm359, %v349, %v352
    %v372 = vsel %vm362, %v358, 1326507024
    %v373 = vsel %vm361, %v355, %v372
    %v374 = vsel %vm360, %v371, %v373
    %v375 = vshll.u32 %v335, 8
    %v376 = vmul.u32.u64.compose %v375, %v374
    %v377 = vextract.low.u32 %v376
    %v378 = vextract.high.u32 %v376
    %v379 = vmul.u32.u64.compose %v375, %v370
    %v380 = vextract.low.u32 %v379
    %v381 = vextract.high.u32 %v379
    %v382 = vmul.u32 %v375, %v366
    %v383 = vadd.s32 %v378, %v380
    %vm384 = vc.u32 %v378, %v380
    %v385 = vadd.s32 %v381, 1
    %v386 = vsel %vm384, %v385, %v381
    %v387 = vadd.s32 %v382, %v386
    %v388 = vadd.s32 %v387, 536870912
    %v389 = vshrl.u32 %v388, 30
    %v390 = vshll.u32 %v389, 30
    %v391 = vsub.s32 %v387, %v390
    %vm392 = vcmp.lt.s32.totalorder %v391, 0
    %v393 = vsub.s32 0, %v391
    %v394 = vsel %vm392, %v393, %v391
    %v395 = vclz %v394
    %v396 = vsub.s32 %v395, 2
    %vm397 = vcmp.gt.s32.totalorder 0, %v396
    %v398 = vsel %vm397, 0, %v396
    %v399 = vsub.s32 32, %v398
    %v400 = vshll.u32 %v391, %v398
    %v401 = vshrl.u32 %v383, %v399
    %v402 = vor.u32 %v400, %v401
    %v403 = vsub.s32 4294967266, %v398
    %v404 = vadd.s32 %v403, 127
    %v405 = vshll.u32 %v404, 23
    %v406 = vor.u32 4788187, %v405
    %v407 = vand.u32 2147483647, %v406
    %v409 = vcvt.s32.f32 %v402
    %v410 = vmul.f32 %v409, %v407
    %v411 = vxor.u32 %v410, 2147483648
    %v412 = vsel %vm329, %v411, %v410
    %v413 = vsub.s32 4, %v389
    %v414 = vsel %vm329, %v413, %v389
    %v415 = vsel %vm328, %v107, %v412
    %v416 = vsel %vm328, 0, %v414
    %v417 = vcosq.f32.pop %v415
    %v418 = vsinq.f32.pop %v415
    %vm419 = vweird.f32 %v107
    %v420 = vand.u32 %v416, 3
    %vm421 = vcmp.lt.s32.totalorder %v420, 2
    %vm422 = vcmp.eq.s32.totalorder %v420, 0
    %v423 = vxor.u32 %v418, 2147483648
    %v424 = vsel %vm422, %v417, %v423
    %vm425 = vcmp.eq.s32.totalorder %v420, 2
    %v426 = vxor.u32 %v417, 2147483648
    %v427 = vsel %vm425, %v426, %v418
    %v428 = vsel %vm421, %v424, %v427
    %v429 = vsel %vm419, nan, %v428
    %v430 = vand.u32 2147483647, %v108
    %vm431 = vcmp.le.f32.partialorder %v430, 0.7853982
    %vm432 = vcmp.lt.s32.totalorder %v108, 0
    %v433 = vand.u32 %v108, 2139095040
    %v434 = vshrl.u32 %v433, 23
    %v435 = vsub.s32 %v434, 127
    %v436 = vand.u32 2147483647, %v108
    %v437 = vand.u32 %v436, 8388607
    %v438 = vor.u32 %v437, 8388608
    %v439 = vsub.s32 0, %v438
    %v440 = vadd.s32 %v435, 1
    %vm441 = vcmp.gt.s32.totalorder %v440, 0
    %v442 = vsel %vm441, %v440, 0
    %v443 = vshrl.u32 %v442, 5
    %v444 = vand.u32 %v442, 31
    %v445 = vsub.s32 32, %v444
    %v446 = vshrl.u32 683565275, %v445
    %v447 = vshll.u32 683565275, %v444
    %v448 = vshrl.u32 2475754826, %v445
    %v449 = vor.u32 %v447, %v448
    %v450 = vshll.u32 2475754826, %v444
    %v451 = vshrl.u32 2131351028, %v445
    %v452 = vor.u32 %v450, %v451
    %v453 = vshll.u32 2131351028, %v444
    %v454 = vshrl.u32 2102212464, %v445
    %v455 = vor.u32 %v453, %v454
    %v456 = vshll.u32 2102212464, %v444
    %v457 = vshrl.u32 920167782, %v445
    %v458 = vor.u32 %v456, %v457
    %v459 = vshll.u32 920167782, %v444
    %v460 = vshrl.u32 1326507024, %v445
    %v461 = vor.u32 %v459, %v460
    %vm462 = vcmp.lt.s32.totalorder %v443, 1
    %vm463 = vcmp.lt.s32.totalorder %v443, 2
    %vm464 = vcmp.lt.s32.totalorder %v443, 3
    %vm465 = vcmp.lt.s32.totalorder %v443, 4
    %v466 = vsel %vm462, %v446, %v449
    %v467 = vsel %vm465, %v455, 2102212464
    %v468 = vsel %vm464, %v452, %v467
    %v469 = vsel %vm463, %v466, %v468
    %v470 = vsel %vm462, %v449, %v452
    %v471 = vsel %vm465, %v458, 920167782
    %v472 = vsel %vm464, %v455, %v471
    %v473 = vsel %vm463, %v470, %v472
    %v474 = vsel %vm462, %v452, %v455
    %v475 = vsel %vm465, %v461, 1326507024
    %v476 = vsel %vm464, %v458, %v475
    %v477 = vsel %vm463, %v474, %v476
    %v478 = vshll.u32 %v438, 8
    %v479 = vmul.u32.u64.compose %v478, %v477
    %v480 = vextract.low.u32 %v479
    %v481 = vextract.high.u32 %v479
    %v482 = vmul.u32.u64.compose %v478, %v473
    %v483 = vextract.low.u32 %v482
    %v484 = vextract.high.u32 %v482
    %v485 = vmul.u32 %v478, %v469
    %v486 = vadd.s32 %v481, %v483
    %vm487 = vc.u32 %v481, %v483
    %v488 = vadd.s32 %v484, 1
    %v489 = vsel %vm487, %v488, %v484
    %v490 = vadd.s32 %v485, %v489
    %v491 = vadd.s32 %v490, 536870912
    %v492 = vshrl.u32 %v491, 30
    %v493 = vshll.u32 %v492, 30
    %v494 = vsub.s32 %v490, %v493
    %vm495 = vcmp.lt.s32.totalorder %v494, 0
    %v496 = vsub.s32 0, %v494
    %v497 = vsel %vm495, %v496, %v494
    %v498 = vclz %v497
    %v499 = vsub.s32 %v498, 2
    %vm500 = vcmp.gt.s32.totalorder 0, %v499
    %v501 = vsel %vm500, 0, %v499
    %v502 = vsub.s32 32, %v501
    %v503 = vshll.u32 %v494, %v501
    %v504 = vshrl.u32 %v486, %v502
    %v505 = vor.u32 %v503, %v504
    %v506 = vsub.s32 4294967266, %v501
    %v507 = vadd.s32 %v506, 127
    %v508 = vshll.u32 %v507, 23
    %v509 = vor.u32 4788187, %v508
    %v510 = vand.u32 2147483647, %v509
    %v512 = vcvt.s32.f32 %v505
    %v513 = vmul.f32 %v512, %v510
    %v514 = vxor.u32 %v513, 2147483648
    %v515 = vsel %vm432, %v514, %v513
    %v516 = vsub.s32 4, %v492
    %v517 = vsel %vm432, %v516, %v492
    %v518 = vsel %vm431, %v108, %v515
    %v519 = vsel %vm431, 0, %v517
    %v520 = vcosq.f32.pop %v518
    %v521 = vsinq.f32.pop %v518
    %vm522 = vweird.f32 %v108
    %v523 = vand.u32 %v519, 3
    %vm524 = vcmp.lt.s32.totalorder %v523, 2
    %vm525 = vcmp.eq.s32.totalorder %v523, 0
    %v526 = vxor.u32 %v521, 2147483648
    %v527 = vsel %vm525, %v520, %v526
    %vm528 = vcmp.eq.s32.totalorder %v523, 2
    %v529 = vxor.u32 %v520, 2147483648
    %v530 = vsel %vm528, %v529, %v521
    %v531 = vsel %vm524, %v527, %v530
    %v532 = vsel %vm522, nan, %v531
    %v533 = vand.u32 2147483647, %v109
    %vm534 = vcmp.le.f32.partialorder %v533, 0.7853982
    %vm535 = vcmp.lt.s32.totalorder %v109, 0
    %v536 = vand.u32 %v109, 2139095040
    %v537 = vshrl.u32 %v536, 23
    %v538 = vsub.s32 %v537, 127
    %v539 = vand.u32 2147483647, %v109
    %v540 = vand.u32 %v539, 8388607
    %v541 = vor.u32 %v540, 8388608
    %v542 = vsub.s32 0, %v541
    %v543 = vadd.s32 %v538, 1
    %vm544 = vcmp.gt.s32.totalorder %v543, 0
    %v545 = vsel %vm544, %v543, 0
    %v546 = vshrl.u32 %v545, 5
    %v547 = vand.u32 %v545, 31
    %v548 = vsub.s32 32, %v547
    %v549 = vshrl.u32 683565275, %v548
    %v550 = vshll.u32 683565275, %v547
    %v551 = vshrl.u32 2475754826, %v548
    %v552 = vor.u32 %v550, %v551
    %v553 = vshll.u32 2475754826, %v547
    %v554 = vshrl.u32 2131351028, %v548
    %v555 = vor.u32 %v553, %v554
    %v556 = vshll.u32 2131351028, %v547
    %v557 = vshrl.u32 2102212464, %v548
    %v558 = vor.u32 %v556, %v557
    %v559 = vshll.u32 2102212464, %v547
    %v560 = vshrl.u32 920167782, %v548
    %v561 = vor.u32 %v559, %v560
    %v562 = vshll.u32 920167782, %v547
    %v563 = vshrl.u32 1326507024, %v548
    %v564 = vor.u32 %v562, %v563
    %vm565 = vcmp.lt.s32.totalorder %v546, 1
    %vm566 = vcmp.lt.s32.totalorder %v546, 2
    %vm567 = vcmp.lt.s32.totalorder %v546, 3
    %vm568 = vcmp.lt.s32.totalorder %v546, 4
    %v569 = vsel %vm565, %v549, %v552
    %v570 = vsel %vm568, %v558, 2102212464
    %v571 = vsel %vm567, %v555, %v570
    %v572 = vsel %vm566, %v569, %v571
    %v573 = vsel %vm565, %v552, %v555
    %v574 = vsel %vm568, %v561, 920167782
    %v575 = vsel %vm567, %v558, %v574
    %v576 = vsel %vm566, %v573, %v575
    %v577 = vsel %vm565, %v555, %v558
    %v578 = vsel %vm568, %v564, 1326507024
    %v579 = vsel %vm567, %v561, %v578
    %v580 = vsel %vm566, %v577, %v579
    %v581 = vshll.u32 %v541, 8
    %v582 = vmul.u32.u64.compose %v581, %v580
    %v583 = vextract.low.u32 %v582
    %v584 = vextract.high.u32 %v582
    %v585 = vmul.u32.u64.compose %v581, %v576
    %v586 = vextract.low.u32 %v585
    %v587 = vextract.high.u32 %v585
    %v588 = vmul.u32 %v581, %v572
    %v589 = vadd.s32 %v584, %v586
    %vm590 = vc.u32 %v584, %v586
    %v591 = vadd.s32 %v587, 1
    %v592 = vsel %vm590, %v591, %v587
    %v593 = vadd.s32 %v588, %v592
    %v594 = vadd.s32 %v593, 536870912
    %v595 = vshrl.u32 %v594, 30
    %v596 = vshll.u32 %v595, 30
    %v597 = vsub.s32 %v593, %v596
    %vm598 = vcmp.lt.s32.totalorder %v597, 0
    %v599 = vsub.s32 0, %v597
    %v600 = vsel %vm598, %v599, %v597
    %v601 = vclz %v600
    %v602 = vsub.s32 %v601, 2
    %vm603 = vcmp.gt.s32.totalorder 0, %v602
    %v604 = vsel %vm603, 0, %v602
    %v605 = vsub.s32 32, %v604
    %v606 = vshll.u32 %v597, %v604
    %v607 = vshrl.u32 %v589, %v605
    %v608 = vor.u32 %v606, %v607
    %v609 = vsub.s32 4294967266, %v604
    %v610 = vadd.s32 %v609, 127
    %v611 = vshll.u32 %v610, 23
    %v612 = vor.u32 4788187, %v611
    %v613 = vand.u32 2147483647, %v612
    %v615 = vcvt.s32.f32 %v608
    %v616 = vmul.f32 %v615, %v613
    %v617 = vxor.u32 %v616, 2147483648
    %v618 = vsel %vm535, %v617, %v616
    %v619 = vsub.s32 4, %v595
    %v620 = vsel %vm535, %v619, %v595
    %v621 = vsel %vm534, %v109, %v618
    %v622 = vsel %vm534, 0, %v620
    %v623 = vcosq.f32.pop %v621
    %v624 = vsinq.f32.pop %v621
    %vm625 = vweird.f32 %v109
    %v626 = vand.u32 %v622, 3
    %vm627 = vcmp.lt.s32.totalorder %v626, 2
    %vm628 = vcmp.eq.s32.totalorder %v626, 0
    %v629 = vxor.u32 %v624, 2147483648
    %v630 = vsel %vm628, %v623, %v629
    %vm631 = vcmp.eq.s32.totalorder %v626, 2
    %v632 = vxor.u32 %v623, 2147483648
    %v633 = vsel %vm631, %v632, %v624
    %v634 = vsel %vm627, %v630, %v633
    %v635 = vsel %vm625, nan, %v634
    %v636 = vand.u32 2147483647, %v110
    %vm637 = vcmp.le.f32.partialorder %v636, 0.7853982
    %vm638 = vcmp.lt.s32.totalorder %v110, 0
    %v639 = vand.u32 %v110, 2139095040
    %v640 = vshrl.u32 %v639, 23
    %v641 = vsub.s32 %v640, 127
    %v642 = vand.u32 2147483647, %v110
    %v643 = vand.u32 %v642, 8388607
    %v644 = vor.u32 %v643, 8388608
    %v645 = vsub.s32 0, %v644
    %v646 = vadd.s32 %v641, 1
    %vm647 = vcmp.gt.s32.totalorder %v646, 0
    %v648 = vsel %vm647, %v646, 0
    %v649 = vshrl.u32 %v648, 5
    %v650 = vand.u32 %v648, 31
    %v651 = vsub.s32 32, %v650
    %v652 = vshrl.u32 683565275, %v651
    %v653 = vshll.u32 683565275, %v650
    %v654 = vshrl.u32 2475754826, %v651
    %v655 = vor.u32 %v653, %v654
    %v656 = vshll.u32 2475754826, %v650
    %v657 = vshrl.u32 2131351028, %v651
    %v658 = vor.u32 %v656, %v657
    %v659 = vshll.u32 2131351028, %v650
    %v660 = vshrl.u32 2102212464, %v651
    %v661 = vor.u32 %v659, %v660
    %v662 = vshll.u32 2102212464, %v650
    %v663 = vshrl.u32 920167782, %v651
    %v664 = vor.u32 %v662, %v663
    %v665 = vshll.u32 920167782, %v650
    %v666 = vshrl.u32 1326507024, %v651
    %v667 = vor.u32 %v665, %v666
    %vm668 = vcmp.lt.s32.totalorder %v649, 1
    %vm669 = vcmp.lt.s32.totalorder %v649, 2
    %vm670 = vcmp.lt.s32.totalorder %v649, 3
    %vm671 = vcmp.lt.s32.totalorder %v649, 4
    %v672 = vsel %vm668, %v652, %v655
    %v673 = vsel %vm671, %v661, 2102212464
    %v674 = vsel %vm670, %v658, %v673
    %v675 = vsel %vm669, %v672, %v674
    %v676 = vsel %vm668, %v655, %v658
    %v677 = vsel %vm671, %v664, 920167782
    %v678 = vsel %vm670, %v661, %v677
    %v679 = vsel %vm669, %v676, %v678
    %v680 = vsel %vm668, %v658, %v661
    %v681 = vsel %vm671, %v667, 1326507024
    %v682 = vsel %vm670, %v664, %v681
    %v683 = vsel %vm669, %v680, %v682
    %v684 = vshll.u32 %v644, 8
    %v685 = vmul.u32.u64.compose %v684, %v683
    %v686 = vextract.low.u32 %v685
    %v687 = vextract.high.u32 %v685
    %v688 = vmul.u32.u64.compose %v684, %v679
    %v689 = vextract.low.u32 %v688
    %v690 = vextract.high.u32 %v688
    %v691 = vmul.u32 %v684, %v675
    %v692 = vadd.s32 %v687, %v689
    %vm693 = vc.u32 %v687, %v689
    %v694 = vadd.s32 %v690, 1
    %v695 = vsel %vm693, %v694, %v690
    %v696 = vadd.s32 %v691, %v695
    %v697 = vadd.s32 %v696, 536870912
    %v698 = vshrl.u32 %v697, 30
    %v699 = vshll.u32 %v698, 30
    %v700 = vsub.s32 %v696, %v699
    %vm701 = vcmp.lt.s32.totalorder %v700, 0
    %v702 = vsub.s32 0, %v700
    %v703 = vsel %vm701, %v702, %v700
    %v704 = vclz %v703
    %v705 = vsub.s32 %v704, 2
    %vm706 = vcmp.gt.s32.totalorder 0, %v705
    %v707 = vsel %vm706, 0, %v705
    %v708 = vsub.s32 32, %v707
    %v709 = vshll.u32 %v700, %v707
    %v710 = vshrl.u32 %v692, %v708
    %v711 = vor.u32 %v709, %v710
    %v712 = vsub.s32 4294967266, %v707
    %v713 = vadd.s32 %v712, 127
    %v714 = vshll.u32 %v713, 23
    %v715 = vor.u32 4788187, %v714
    %v716 = vand.u32 2147483647, %v715
    %v718 = vcvt.s32.f32 %v711
    %v719 = vmul.f32 %v718, %v716
    %v720 = vxor.u32 %v719, 2147483648
    %v721 = vsel %vm638, %v720, %v719
    %v722 = vsub.s32 4, %v698
    %v723 = vsel %vm638, %v722, %v698
    %v724 = vsel %vm637, %v110, %v721
    %v725 = vsel %vm637, 0, %v723
    %v726 = vcosq.f32.pop %v724
    %v727 = vsinq.f32.pop %v724
    %vm728 = vweird.f32 %v110
    %v729 = vand.u32 %v725, 3
    %vm730 = vcmp.lt.s32.totalorder %v729, 2
    %vm731 = vcmp.eq.s32.totalorder %v729, 0
    %v732 = vxor.u32 %v727, 2147483648
    %v733 = vsel %vm731, %v726, %v732
    %vm734 = vcmp.eq.s32.totalorder %v729, 2
    %v735 = vxor.u32 %v726, 2147483648
    %v736 = vsel %vm734, %v735, %v727
    %v737 = vsel %vm730, %v733, %v736
    %v738 = vsel %vm728, nan, %v737
    %v739 = vand.u32 2147483647, %v111
    %vm740 = vcmp.le.f32.partialorder %v739, 0.7853982
    %vm741 = vcmp.lt.s32.totalorder %v111, 0
    %v742 = vand.u32 %v111, 2139095040
    %v743 = vshrl.u32 %v742, 23
    %v744 = vsub.s32 %v743, 127
    %v745 = vand.u32 2147483647, %v111
    %v746 = vand.u32 %v745, 8388607
    %v747 = vor.u32 %v746, 8388608
    %v748 = vsub.s32 0, %v747
    %v749 = vadd.s32 %v744, 1
    %vm750 = vcmp.gt.s32.totalorder %v749, 0
    %v751 = vsel %vm750, %v749, 0
    %v752 = vshrl.u32 %v751, 5
    %v753 = vand.u32 %v751, 31
    %v754 = vsub.s32 32, %v753
    %v755 = vshrl.u32 683565275, %v754
    %v756 = vshll.u32 683565275, %v753
    %v757 = vshrl.u32 2475754826, %v754
    %v758 = vor.u32 %v756, %v757
    %v759 = vshll.u32 2475754826, %v753
    %v760 = vshrl.u32 2131351028, %v754
    %v761 = vor.u32 %v759, %v760
    %v762 = vshll.u32 2131351028, %v753
    %v763 = vshrl.u32 2102212464, %v754
    %v764 = vor.u32 %v762, %v763
    %v765 = vshll.u32 2102212464, %v753
    %v766 = vshrl.u32 920167782, %v754
    %v767 = vor.u32 %v765, %v766
    %v768 = vshll.u32 920167782, %v753
    %v769 = vshrl.u32 1326507024, %v754
    %v770 = vor.u32 %v768, %v769
    %vm771 = vcmp.lt.s32.totalorder %v752, 1
    %vm772 = vcmp.lt.s32.totalorder %v752, 2
    %vm773 = vcmp.lt.s32.totalorder %v752, 3
    %vm774 = vcmp.lt.s32.totalorder %v752, 4
    %v775 = vsel %vm771, %v755, %v758
    %v776 = vsel %vm774, %v764, 2102212464
    %v777 = vsel %vm773, %v761, %v776
    %v778 = vsel %vm772, %v775, %v777
    %v779 = vsel %vm771, %v758, %v761
    %v780 = vsel %vm774, %v767, 920167782
    %v781 = vsel %vm773, %v764, %v780
    %v782 = vsel %vm772, %v779, %v781
    %v783 = vsel %vm771, %v761, %v764
    %v784 = vsel %vm774, %v770, 1326507024
    %v785 = vsel %vm773, %v767, %v784
    %v786 = vsel %vm772, %v783, %v785
    %v787 = vshll.u32 %v747, 8
    %v788 = vmul.u32.u64.compose %v787, %v786
    %v789 = vextract.low.u32 %v788
    %v790 = vextract.high.u32 %v788
    %v791 = vmul.u32.u64.compose %v787, %v782
    %v792 = vextract.low.u32 %v791
    %v793 = vextract.high.u32 %v791
    %v794 = vmul.u32 %v787, %v778
    %v795 = vadd.s32 %v790, %v792
    %vm796 = vc.u32 %v790, %v792
    %v797 = vadd.s32 %v793, 1
    %v798 = vsel %vm796, %v797, %v793
    %v799 = vadd.s32 %v794, %v798
    %v800 = vadd.s32 %v799, 536870912
    %v801 = vshrl.u32 %v800, 30
    %v802 = vshll.u32 %v801, 30
    %v803 = vsub.s32 %v799, %v802
    %vm804 = vcmp.lt.s32.totalorder %v803, 0
    %v805 = vsub.s32 0, %v803
    %v806 = vsel %vm804, %v805, %v803
    %v807 = vclz %v806
    %v808 = vsub.s32 %v807, 2
    %vm809 = vcmp.gt.s32.totalorder 0, %v808
    %v810 = vsel %vm809, 0, %v808
    %v811 = vsub.s32 32, %v810
    %v812 = vshll.u32 %v803, %v810
    %v813 = vshrl.u32 %v795, %v811
    %v814 = vor.u32 %v812, %v813
    %v815 = vsub.s32 4294967266, %v810
    %v816 = vadd.s32 %v815, 127
    %v817 = vshll.u32 %v816, 23
    %v818 = vor.u32 4788187, %v817
    %v819 = vand.u32 2147483647, %v818
    %v821 = vcvt.s32.f32 %v814
    %v822 = vmul.f32 %v821, %v819
    %v823 = vxor.u32 %v822, 2147483648
    %v824 = vsel %vm741, %v823, %v822
    %v825 = vsub.s32 4, %v801
    %v826 = vsel %vm741, %v825, %v801
    %v827 = vsel %vm740, %v111, %v824
    %v828 = vsel %vm740, 0, %v826
    %v829 = vcosq.f32.pop %v827
    %v830 = vsinq.f32.pop %v827
    %vm831 = vweird.f32 %v111
    %v832 = vand.u32 %v828, 3
    %vm833 = vcmp.lt.s32.totalorder %v832, 2
    %vm834 = vcmp.eq.s32.totalorder %v832, 0
    %v835 = vxor.u32 %v830, 2147483648
    %v836 = vsel %vm834, %v829, %v835
    %vm837 = vcmp.eq.s32.totalorder %v832, 2
    %v838 = vxor.u32 %v829, 2147483648
    %v839 = vsel %vm837, %v838, %v830
    %v840 = vsel %vm833, %v836, %v839
    %v841 = vsel %vm831, nan, %v840
    %v842 = vand.u32 2147483647, %v112
    %vm843 = vcmp.le.f32.partialorder %v842, 0.7853982
    %vm844 = vcmp.lt.s32.totalorder %v112, 0
    %v845 = vand.u32 %v112, 2139095040
    %v846 = vshrl.u32 %v845, 23
    %v847 = vsub.s32 %v846, 127
    %v848 = vand.u32 2147483647, %v112
    %v849 = vand.u32 %v848, 8388607
    %v850 = vor.u32 %v849, 8388608
    %v851 = vsub.s32 0, %v850
    %v852 = vadd.s32 %v847, 1
    %vm853 = vcmp.gt.s32.totalorder %v852, 0
    %v854 = vsel %vm853, %v852, 0
    %v855 = vshrl.u32 %v854, 5
    %v856 = vand.u32 %v854, 31
    %v857 = vsub.s32 32, %v856
    %v858 = vshrl.u32 683565275, %v857
    %v859 = vshll.u32 683565275, %v856
    %v860 = vshrl.u32 2475754826, %v857
    %v861 = vor.u32 %v859, %v860
    %v862 = vshll.u32 2475754826, %v856
    %v863 = vshrl.u32 2131351028, %v857
    %v864 = vor.u32 %v862, %v863
    %v865 = vshll.u32 2131351028, %v856
    %v866 = vshrl.u32 2102212464, %v857
    %v867 = vor.u32 %v865, %v866
    %v868 = vshll.u32 2102212464, %v856
    %v869 = vshrl.u32 920167782, %v857
    %v870 = vor.u32 %v868, %v869
    %v871 = vshll.u32 920167782, %v856
    %v872 = vshrl.u32 1326507024, %v857
    %v873 = vor.u32 %v871, %v872
    %vm874 = vcmp.lt.s32.totalorder %v855, 1
    %vm875 = vcmp.lt.s32.totalorder %v855, 2
    %vm876 = vcmp.lt.s32.totalorder %v855, 3
    %vm877 = vcmp.lt.s32.totalorder %v855, 4
    %v878 = vsel %vm874, %v858, %v861
    %v879 = vsel %vm877, %v867, 2102212464
    %v880 = vsel %vm876, %v864, %v879
    %v881 = vsel %vm875, %v878, %v880
    %v882 = vsel %vm874, %v861, %v864
    %v883 = vsel %vm877, %v870, 920167782
    %v884 = vsel %vm876, %v867, %v883
    %v885 = vsel %vm875, %v882, %v884
    %v886 = vsel %vm874, %v864, %v867
    %v887 = vsel %vm877, %v873, 1326507024
    %v888 = vsel %vm876, %v870, %v887
    %v889 = vsel %vm875, %v886, %v888
    %v890 = vshll.u32 %v850, 8
    %v891 = vmul.u32.u64.compose %v890, %v889
    %v892 = vextract.low.u32 %v891
    %v893 = vextract.high.u32 %v891
    %v894 = vmul.u32.u64.compose %v890, %v885
    %v895 = vextract.low.u32 %v894
    %v896 = vextract.high.u32 %v894
    %v897 = vmul.u32 %v890, %v881
    %v898 = vadd.s32 %v893, %v895
    %vm899 = vc.u32 %v893, %v895
    %v900 = vadd.s32 %v896, 1
    %v901 = vsel %vm899, %v900, %v896
    %v902 = vadd.s32 %v897, %v901
    %v903 = vadd.s32 %v902, 536870912
    %v904 = vshrl.u32 %v903, 30
    %v905 = vshll.u32 %v904, 30
    %v906 = vsub.s32 %v902, %v905
    %vm907 = vcmp.lt.s32.totalorder %v906, 0
    %v908 = vsub.s32 0, %v906
    %v909 = vsel %vm907, %v908, %v906
    %v910 = vclz %v909
    %v911 = vsub.s32 %v910, 2
    %vm912 = vcmp.gt.s32.totalorder 0, %v911
    %v913 = vsel %vm912, 0, %v911
    %v914 = vsub.s32 32, %v913
    %v915 = vshll.u32 %v906, %v913
    %v916 = vshrl.u32 %v898, %v914
    %v917 = vor.u32 %v915, %v916
    %v918 = vsub.s32 4294967266, %v913
    %v919 = vadd.s32 %v918, 127
    %v920 = vshll.u32 %v919, 23
    %v921 = vor.u32 4788187, %v920
    %v922 = vand.u32 2147483647, %v921
    %v924 = vcvt.s32.f32 %v917
    %v925 = vmul.f32 %v924, %v922
    %v926 = vxor.u32 %v925, 2147483648
    %v927 = vsel %vm844, %v926, %v925
    %v928 = vsub.s32 4, %v904
    %v929 = vsel %vm844, %v928, %v904
    %v930 = vsel %vm843, %v112, %v927
    %v931 = vsel %vm843, 0, %v929
    %v932 = vcosq.f32.pop %v930
    %v933 = vsinq.f32.pop %v930
    %vm934 = vweird.f32 %v112
    %v935 = vand.u32 %v931, 3
    %vm936 = vcmp.lt.s32.totalorder %v935, 2
    %vm937 = vcmp.eq.s32.totalorder %v935, 0
    %v938 = vxor.u32 %v933, 2147483648
    %v939 = vsel %vm937, %v932, %v938
    %vm940 = vcmp.eq.s32.totalorder %v935, 2
    %v941 = vxor.u32 %v932, 2147483648
    %v942 = vsel %vm940, %v941, %v933
    %v943 = vsel %vm936, %v939, %v942
    %v944 = vsel %vm934, nan, %v943
    %v945 = vand.u32 2147483647, %v113
    %vm946 = vcmp.le.f32.partialorder %v945, 0.7853982
    %vm947 = vcmp.lt.s32.totalorder %v113, 0
    %v948 = vand.u32 %v113, 2139095040
    %v949 = vshrl.u32 %v948, 23
    %v950 = vsub.s32 %v949, 127
    %v951 = vand.u32 2147483647, %v113
    %v952 = vand.u32 %v951, 8388607
    %v953 = vor.u32 %v952, 8388608
    %v954 = vsub.s32 0, %v953
    %v955 = vadd.s32 %v950, 1
    %vm956 = vcmp.gt.s32.totalorder %v955, 0
    %v957 = vsel %vm956, %v955, 0
    %v958 = vshrl.u32 %v957, 5
    %v959 = vand.u32 %v957, 31
    %v960 = vsub.s32 32, %v959
    %v961 = vshrl.u32 683565275, %v960
    %v962 = vshll.u32 683565275, %v959
    %v963 = vshrl.u32 2475754826, %v960
    %v964 = vor.u32 %v962, %v963
    %v965 = vshll.u32 2475754826, %v959
    %v966 = vshrl.u32 2131351028, %v960
    %v967 = vor.u32 %v965, %v966
    %v968 = vshll.u32 2131351028, %v959
    %v969 = vshrl.u32 2102212464, %v960
    %v970 = vor.u32 %v968, %v969
    %v971 = vshll.u32 2102212464, %v959
    %v972 = vshrl.u32 920167782, %v960
    %v973 = vor.u32 %v971, %v972
    %v974 = vshll.u32 920167782, %v959
    %v975 = vshrl.u32 1326507024, %v960
    %v976 = vor.u32 %v974, %v975
    %vm977 = vcmp.lt.s32.totalorder %v958, 1
    %vm978 = vcmp.lt.s32.totalorder %v958, 2
    %vm979 = vcmp.lt.s32.totalorder %v958, 3
    %vm980 = vcmp.lt.s32.totalorder %v958, 4
    %v981 = vsel %vm977, %v961, %v964
    %v982 = vsel %vm980, %v970, 2102212464
    %v983 = vsel %vm979, %v967, %v982
    %v984 = vsel %vm978, %v981, %v983
    %v985 = vsel %vm977, %v964, %v967
    %v986 = vsel %vm980, %v973, 920167782
    %v987 = vsel %vm979, %v970, %v986
    %v988 = vsel %vm978, %v985, %v987
    %v989 = vsel %vm977, %v967, %v970
    %v990 = vsel %vm980, %v976, 1326507024
    %v991 = vsel %vm979, %v973, %v990
    %v992 = vsel %vm978, %v989, %v991
    %v993 = vshll.u32 %v953, 8
    %v994 = vmul.u32.u64.compose %v993, %v992
    %v995 = vextract.low.u32 %v994
    %v996 = vextract.high.u32 %v994
    %v997 = vmul.u32.u64.compose %v993, %v988
    %v998 = vextract.low.u32 %v997
    %v999 = vextract.high.u32 %v997
    %v1000 = vmul.u32 %v993, %v984
    %v1001 = vadd.s32 %v996, %v998
    %vm1002 = vc.u32 %v996, %v998
    %v1003 = vadd.s32 %v999, 1
    %v1004 = vsel %vm1002, %v1003, %v999
    %v1005 = vadd.s32 %v1000, %v1004
    %v1006 = vadd.s32 %v1005, 536870912
    %v1007 = vshrl.u32 %v1006, 30
    %v1008 = vshll.u32 %v1007, 30
    %v1009 = vsub.s32 %v1005, %v1008
    %vm1010 = vcmp.lt.s32.totalorder %v1009, 0
    %v1011 = vsub.s32 0, %v1009
    %v1012 = vsel %vm1010, %v1011, %v1009
    %v1013 = vclz %v1012
    %v1014 = vsub.s32 %v1013, 2
    %vm1015 = vcmp.gt.s32.totalorder 0, %v1014
    %v1016 = vsel %vm1015, 0, %v1014
    %v1017 = vsub.s32 32, %v1016
    %v1018 = vshll.u32 %v1009, %v1016
    %v1019 = vshrl.u32 %v1001, %v1017
    %v1020 = vor.u32 %v1018, %v1019
    %v1021 = vsub.s32 4294967266, %v1016
    %v1022 = vadd.s32 %v1021, 127
    %v1023 = vshll.u32 %v1022, 23
    %v1024 = vor.u32 4788187, %v1023
    %v1025 = vand.u32 2147483647, %v1024
    %v1027 = vcvt.s32.f32 %v1020
    %v1028 = vmul.f32 %v1027, %v1025
    %v1029 = vxor.u32 %v1028, 2147483648
    %v1030 = vsel %vm947, %v1029, %v1028
    %v1031 = vsub.s32 4, %v1007
    %v1032 = vsel %vm947, %v1031, %v1007
    %v1033 = vsel %vm946, %v113, %v1030
    %v1034 = vsel %vm946, 0, %v1032
    %v1035 = vcosq.f32.pop %v1033
    %v1036 = vsinq.f32.pop %v1033
    %vm1037 = vweird.f32 %v113
    %v1038 = vand.u32 %v1034, 3
    %vm1039 = vcmp.lt.s32.totalorder %v1038, 2
    %vm1040 = vcmp.eq.s32.totalorder %v1038, 0
    %v1041 = vxor.u32 %v1036, 2147483648
    %v1042 = vsel %vm1040, %v1035, %v1041
    %vm1043 = vcmp.eq.s32.totalorder %v1038, 2
    %v1044 = vxor.u32 %v1035, 2147483648
    %v1045 = vsel %vm1043, %v1044, %v1036
    %v1046 = vsel %vm1039, %v1042, %v1045
    %v1047 = vsel %vm1037, nan, %v1046
    %v1048 = vand.u32 2147483647, %v114
    %vm1049 = vcmp.le.f32.partialorder %v1048, 0.7853982
    %vm1050 = vcmp.lt.s32.totalorder %v114, 0
    %v1051 = vand.u32 %v114, 2139095040
    %v1052 = vshrl.u32 %v1051, 23
    %v1053 = vsub.s32 %v1052, 127
    %v1054 = vand.u32 2147483647, %v114
    %v1055 = vand.u32 %v1054, 8388607
    %v1056 = vor.u32 %v1055, 8388608
    %v1057 = vsub.s32 0, %v1056
    %v1058 = vadd.s32 %v1053, 1
    %vm1059 = vcmp.gt.s32.totalorder %v1058, 0
    %v1060 = vsel %vm1059, %v1058, 0
    %v1061 = vshrl.u32 %v1060, 5
    %v1062 = vand.u32 %v1060, 31
    %v1063 = vsub.s32 32, %v1062
    %v1064 = vshrl.u32 683565275, %v1063
    %v1065 = vshll.u32 683565275, %v1062
    %v1066 = vshrl.u32 2475754826, %v1063
    %v1067 = vor.u32 %v1065, %v1066
    %v1068 = vshll.u32 2475754826, %v1062
    %v1069 = vshrl.u32 2131351028, %v1063
    %v1070 = vor.u32 %v1068, %v1069
    %v1071 = vshll.u32 2131351028, %v1062
    %v1072 = vshrl.u32 2102212464, %v1063
    %v1073 = vor.u32 %v1071, %v1072
    %v1074 = vshll.u32 2102212464, %v1062
    %v1075 = vshrl.u32 920167782, %v1063
    %v1076 = vor.u32 %v1074, %v1075
    %v1077 = vshll.u32 920167782, %v1062
    %v1078 = vshrl.u32 1326507024, %v1063
    %v1079 = vor.u32 %v1077, %v1078
    %vm1080 = vcmp.lt.s32.totalorder %v1061, 1
    %vm1081 = vcmp.lt.s32.totalorder %v1061, 2
    %vm1082 = vcmp.lt.s32.totalorder %v1061, 3
    %vm1083 = vcmp.lt.s32.totalorder %v1061, 4
    %v1084 = vsel %vm1080, %v1064, %v1067
    %v1085 = vsel %vm1083, %v1073, 2102212464
    %v1086 = vsel %vm1082, %v1070, %v1085
    %v1087 = vsel %vm1081, %v1084, %v1086
    %v1088 = vsel %vm1080, %v1067, %v1070
    %v1089 = vsel %vm1083, %v1076, 920167782
    %v1090 = vsel %vm1082, %v1073, %v1089
    %v1091 = vsel %vm1081, %v1088, %v1090
    %v1092 = vsel %vm1080, %v1070, %v1073
    %v1093 = vsel %vm1083, %v1079, 1326507024
    %v1094 = vsel %vm1082, %v1076, %v1093
    %v1095 = vsel %vm1081, %v1092, %v1094
    %v1096 = vshll.u32 %v1056, 8
    %v1097 = vmul.u32.u64.compose %v1096, %v1095
    %v1098 = vextract.low.u32 %v1097
    %v1099 = vextract.high.u32 %v1097
    %v1100 = vmul.u32.u64.compose %v1096, %v1091
    %v1101 = vextract.low.u32 %v1100
    %v1102 = vextract.high.u32 %v1100
    %v1103 = vmul.u32 %v1096, %v1087
    %v1104 = vadd.s32 %v1099, %v1101
    %vm1105 = vc.u32 %v1099, %v1101
    %v1106 = vadd.s32 %v1102, 1
    %v1107 = vsel %vm1105, %v1106, %v1102
    %v1108 = vadd.s32 %v1103, %v1107
    %v1109 = vadd.s32 %v1108, 536870912
    %v1110 = vshrl.u32 %v1109, 30
    %v1111 = vshll.u32 %v1110, 30
    %v1112 = vsub.s32 %v1108, %v1111
    %vm1113 = vcmp.lt.s32.totalorder %v1112, 0
    %v1114 = vsub.s32 0, %v1112
    %v1115 = vsel %vm1113, %v1114, %v1112
    %v1116 = vclz %v1115
    %v1117 = vsub.s32 %v1116, 2
    %vm1118 = vcmp.gt.s32.totalorder 0, %v1117
    %v1119 = vsel %vm1118, 0, %v1117
    %v1120 = vsub.s32 32, %v1119
    %v1121 = vshll.u32 %v1112, %v1119
    %v1122 = vshrl.u32 %v1104, %v1120
    %v1123 = vor.u32 %v1121, %v1122
    %v1124 = vsub.s32 4294967266, %v1119
    %v1125 = vadd.s32 %v1124, 127
    %v1126 = vshll.u32 %v1125, 23
    %v1127 = vor.u32 4788187, %v1126
    %v1128 = vand.u32 2147483647, %v1127
    %v1130 = vcvt.s32.f32 %v1123
    %v1131 = vmul.f32 %v1130, %v1128
    %v1132 = vxor.u32 %v1131, 2147483648
    %v1133 = vsel %vm1050, %v1132, %v1131
    %v1134 = vsub.s32 4, %v1110
    %v1135 = vsel %vm1050, %v1134, %v1110
    %v1136 = vsel %vm1049, %v114, %v1133
    %v1137 = vsel %vm1049, 0, %v1135
    %v1138 = vcosq.f32.pop %v1136
    %v1139 = vsinq.f32.pop %v1136
    %vm1140 = vweird.f32 %v114
    %v1141 = vand.u32 %v1137, 3
    %vm1142 = vcmp.lt.s32.totalorder %v1141, 2
    %vm1143 = vcmp.eq.s32.totalorder %v1141, 0
    %v1144 = vxor.u32 %v1139, 2147483648
    %v1145 = vsel %vm1143, %v1138, %v1144
    %vm1146 = vcmp.eq.s32.totalorder %v1141, 2
    %v1147 = vxor.u32 %v1138, 2147483648
    %v1148 = vsel %vm1146, %v1147, %v1139
    %v1149 = vsel %vm1142, %v1145, %v1148
    %v1150 = vsel %vm1140, nan, %v1149
    %v1151 = vand.u32 2147483647, %v115
    %vm1152 = vcmp.le.f32.partialorder %v1151, 0.7853982
    %vm1153 = vcmp.lt.s32.totalorder %v115, 0
    %v1154 = vand.u32 %v115, 2139095040
    %v1155 = vshrl.u32 %v1154, 23
    %v1156 = vsub.s32 %v1155, 127
    %v1157 = vand.u32 2147483647, %v115
    %v1158 = vand.u32 %v1157, 8388607
    %v1159 = vor.u32 %v1158, 8388608
    %v1160 = vsub.s32 0, %v1159
    %v1161 = vadd.s32 %v1156, 1
    %vm1162 = vcmp.gt.s32.totalorder %v1161, 0
    %v1163 = vsel %vm1162, %v1161, 0
    %v1164 = vshrl.u32 %v1163, 5
    %v1165 = vand.u32 %v1163, 31
    %v1166 = vsub.s32 32, %v1165
    %v1167 = vshrl.u32 683565275, %v1166
    %v1168 = vshll.u32 683565275, %v1165
    %v1169 = vshrl.u32 2475754826, %v1166
    %v1170 = vor.u32 %v1168, %v1169
    %v1171 = vshll.u32 2475754826, %v1165
    %v1172 = vshrl.u32 2131351028, %v1166
    %v1173 = vor.u32 %v1171, %v1172
    %v1174 = vshll.u32 2131351028, %v1165
    %v1175 = vshrl.u32 2102212464, %v1166
    %v1176 = vor.u32 %v1174, %v1175
    %v1177 = vshll.u32 2102212464, %v1165
    %v1178 = vshrl.u32 920167782, %v1166
    %v1179 = vor.u32 %v1177, %v1178
    %v1180 = vshll.u32 920167782, %v1165
    %v1181 = vshrl.u32 1326507024, %v1166
    %v1182 = vor.u32 %v1180, %v1181
    %vm1183 = vcmp.lt.s32.totalorder %v1164, 1
    %vm1184 = vcmp.lt.s32.totalorder %v1164, 2
    %vm1185 = vcmp.lt.s32.totalorder %v1164, 3
    %vm1186 = vcmp.lt.s32.totalorder %v1164, 4
    %v1187 = vsel %vm1183, %v1167, %v1170
    %v1188 = vsel %vm1186, %v1176, 2102212464
    %v1189 = vsel %vm1185, %v1173, %v1188
    %v1190 = vsel %vm1184, %v1187, %v1189
    %v1191 = vsel %vm1183, %v1170, %v1173
    %v1192 = vsel %vm1186, %v1179, 920167782
    %v1193 = vsel %vm1185, %v1176, %v1192
    %v1194 = vsel %vm1184, %v1191, %v1193
    %v1195 = vsel %vm1183, %v1173, %v1176
    %v1196 = vsel %vm1186, %v1182, 1326507024
    %v1197 = vsel %vm1185, %v1179, %v1196
    %v1198 = vsel %vm1184, %v1195, %v1197
    %v1199 = vshll.u32 %v1159, 8
    %v1200 = vmul.u32.u64.compose %v1199, %v1198
    %v1201 = vextract.low.u32 %v1200
    %v1202 = vextract.high.u32 %v1200
    %v1203 = vmul.u32.u64.compose %v1199, %v1194
    %v1204 = vextract.low.u32 %v1203
    %v1205 = vextract.high.u32 %v1203
    %v1206 = vmul.u32 %v1199, %v1190
    %v1207 = vadd.s32 %v1202, %v1204
    %vm1208 = vc.u32 %v1202, %v1204
    %v1209 = vadd.s32 %v1205, 1
    %v1210 = vsel %vm1208, %v1209, %v1205
    %v1211 = vadd.s32 %v1206, %v1210
    %v1212 = vadd.s32 %v1211, 536870912
    %v1213 = vshrl.u32 %v1212, 30
    %v1214 = vshll.u32 %v1213, 30
    %v1215 = vsub.s32 %v1211, %v1214
    %vm1216 = vcmp.lt.s32.totalorder %v1215, 0
    %v1217 = vsub.s32 0, %v1215
    %v1218 = vsel %vm1216, %v1217, %v1215
    %v1219 = vclz %v1218
    %v1220 = vsub.s32 %v1219, 2
    %vm1221 = vcmp.gt.s32.totalorder 0, %v1220
    %v1222 = vsel %vm1221, 0, %v1220
    %v1223 = vsub.s32 32, %v1222
    %v1224 = vshll.u32 %v1215, %v1222
    %v1225 = vshrl.u32 %v1207, %v1223
    %v1226 = vor.u32 %v1224, %v1225
    %v1227 = vsub.s32 4294967266, %v1222
    %v1228 = vadd.s32 %v1227, 127
    %v1229 = vshll.u32 %v1228, 23
    %v1230 = vor.u32 4788187, %v1229
    %v1231 = vand.u32 2147483647, %v1230
    %v1233 = vcvt.s32.f32 %v1226
    %v1234 = vmul.f32 %v1233, %v1231
    %v1235 = vxor.u32 %v1234, 2147483648
    %v1236 = vsel %vm1153, %v1235, %v1234
    %v1237 = vsub.s32 4, %v1213
    %v1238 = vsel %vm1153, %v1237, %v1213
    %v1239 = vsel %vm1152, %v115, %v1236
    %v1240 = vsel %vm1152, 0, %v1238
    %v1241 = vcosq.f32.pop %v1239
    %v1242 = vsinq.f32.pop %v1239
    %vm1243 = vweird.f32 %v115
    %v1244 = vand.u32 %v1240, 3
    %vm1245 = vcmp.lt.s32.totalorder %v1244, 2
    %vm1246 = vcmp.eq.s32.totalorder %v1244, 0
    %v1247 = vxor.u32 %v1242, 2147483648
    %v1248 = vsel %vm1246, %v1241, %v1247
    %vm1249 = vcmp.eq.s32.totalorder %v1244, 2
    %v1250 = vxor.u32 %v1241, 2147483648
    %v1251 = vsel %vm1249, %v1250, %v1242
    %v1252 = vsel %vm1245, %v1248, %v1251
    %v1253 = vsel %vm1243, nan, %v1252
    %v1254 = vand.u32 2147483647, %v116
    %vm1255 = vcmp.le.f32.partialorder %v1254, 0.7853982
    %vm1256 = vcmp.lt.s32.totalorder %v116, 0
    %v1257 = vand.u32 %v116, 2139095040
    %v1258 = vshrl.u32 %v1257, 23
    %v1259 = vsub.s32 %v1258, 127
    %v1260 = vand.u32 2147483647, %v116
    %v1261 = vand.u32 %v1260, 8388607
    %v1262 = vor.u32 %v1261, 8388608
    %v1263 = vsub.s32 0, %v1262
    %v1264 = vadd.s32 %v1259, 1
    %vm1265 = vcmp.gt.s32.totalorder %v1264, 0
    %v1266 = vsel %vm1265, %v1264, 0
    %v1267 = vshrl.u32 %v1266, 5
    %v1268 = vand.u32 %v1266, 31
    %v1269 = vsub.s32 32, %v1268
    %v1270 = vshrl.u32 683565275, %v1269
    %v1271 = vshll.u32 683565275, %v1268
    %v1272 = vshrl.u32 2475754826, %v1269
    %v1273 = vor.u32 %v1271, %v1272
    %v1274 = vshll.u32 2475754826, %v1268
    %v1275 = vshrl.u32 2131351028, %v1269
    %v1276 = vor.u32 %v1274, %v1275
    %v1277 = vshll.u32 2131351028, %v1268
    %v1278 = vshrl.u32 2102212464, %v1269
    %v1279 = vor.u32 %v1277, %v1278
    %v1280 = vshll.u32 2102212464, %v1268
    %v1281 = vshrl.u32 920167782, %v1269
    %v1282 = vor.u32 %v1280, %v1281
    %v1283 = vshll.u32 920167782, %v1268
    %v1284 = vshrl.u32 1326507024, %v1269
    %v1285 = vor.u32 %v1283, %v1284
    %vm1286 = vcmp.lt.s32.totalorder %v1267, 1
    %vm1287 = vcmp.lt.s32.totalorder %v1267, 2
    %vm1288 = vcmp.lt.s32.totalorder %v1267, 3
    %vm1289 = vcmp.lt.s32.totalorder %v1267, 4
    %v1290 = vsel %vm1286, %v1270, %v1273
    %v1291 = vsel %vm1289, %v1279, 2102212464
    %v1292 = vsel %vm1288, %v1276, %v1291
    %v1293 = vsel %vm1287, %v1290, %v1292
    %v1294 = vsel %vm1286, %v1273, %v1276
    %v1295 = vsel %vm1289, %v1282, 920167782
    %v1296 = vsel %vm1288, %v1279, %v1295
    %v1297 = vsel %vm1287, %v1294, %v1296
    %v1298 = vsel %vm1286, %v1276, %v1279
    %v1299 = vsel %vm1289, %v1285, 1326507024
    %v1300 = vsel %vm1288, %v1282, %v1299
    %v1301 = vsel %vm1287, %v1298, %v1300
    %v1302 = vshll.u32 %v1262, 8
    %v1303 = vmul.u32.u64.compose %v1302, %v1301
    %v1304 = vextract.low.u32 %v1303
    %v1305 = vextract.high.u32 %v1303
    %v1306 = vmul.u32.u64.compose %v1302, %v1297
    %v1307 = vextract.low.u32 %v1306
    %v1308 = vextract.high.u32 %v1306
    %v1309 = vmul.u32 %v1302, %v1293
    %v1310 = vadd.s32 %v1305, %v1307
    %vm1311 = vc.u32 %v1305, %v1307
    %v1312 = vadd.s32 %v1308, 1
    %v1313 = vsel %vm1311, %v1312, %v1308
    %v1314 = vadd.s32 %v1309, %v1313
    %v1315 = vadd.s32 %v1314, 536870912
    %v1316 = vshrl.u32 %v1315, 30
    %v1317 = vshll.u32 %v1316, 30
    %v1318 = vsub.s32 %v1314, %v1317
    %vm1319 = vcmp.lt.s32.totalorder %v1318, 0
    %v1320 = vsub.s32 0, %v1318
    %v1321 = vsel %vm1319, %v1320, %v1318
    %v1322 = vclz %v1321
    %v1323 = vsub.s32 %v1322, 2
    %vm1324 = vcmp.gt.s32.totalorder 0, %v1323
    %v1325 = vsel %vm1324, 0, %v1323
    %v1326 = vsub.s32 32, %v1325
    %v1327 = vshll.u32 %v1318, %v1325
    %v1328 = vshrl.u32 %v1310, %v1326
    %v1329 = vor.u32 %v1327, %v1328
    %v1330 = vsub.s32 4294967266, %v1325
    %v1331 = vadd.s32 %v1330, 127
    %v1332 = vshll.u32 %v1331, 23
    %v1333 = vor.u32 4788187, %v1332
    %v1334 = vand.u32 2147483647, %v1333
    %v1336 = vcvt.s32.f32 %v1329
    %v1337 = vmul.f32 %v1336, %v1334
    %v1338 = vxor.u32 %v1337, 2147483648
    %v1339 = vsel %vm1256, %v1338, %v1337
    %v1340 = vsub.s32 4, %v1316
    %v1341 = vsel %vm1256, %v1340, %v1316
    %v1342 = vsel %vm1255, %v116, %v1339
    %v1343 = vsel %vm1255, 0, %v1341
    %v1344 = vcosq.f32.pop %v1342
    %v1345 = vsinq.f32.pop %v1342
    %vm1346 = vweird.f32 %v116
    %v1347 = vand.u32 %v1343, 3
    %vm1348 = vcmp.lt.s32.totalorder %v1347, 2
    %vm1349 = vcmp.eq.s32.totalorder %v1347, 0
    %v1350 = vxor.u32 %v1345, 2147483648
    %v1351 = vsel %vm1349, %v1344, %v1350
    %vm1352 = vcmp.eq.s32.totalorder %v1347, 2
    %v1353 = vxor.u32 %v1344, 2147483648
    %v1354 = vsel %vm1352, %v1353, %v1345
    %v1355 = vsel %vm1348, %v1351, %v1354
    %v1356 = vsel %vm1346, nan, %v1355
    %v1357 = vand.u32 2147483647, %v117
    %vm1358 = vcmp.le.f32.partialorder %v1357, 0.7853982
    %vm1359 = vcmp.lt.s32.totalorder %v117, 0
    %v1360 = vand.u32 %v117, 2139095040
    %v1361 = vshrl.u32 %v1360, 23
    %v1362 = vsub.s32 %v1361, 127
    %v1363 = vand.u32 2147483647, %v117
    %v1364 = vand.u32 %v1363, 8388607
    %v1365 = vor.u32 %v1364, 8388608
    %v1366 = vsub.s32 0, %v1365
    %v1367 = vadd.s32 %v1362, 1
    %vm1368 = vcmp.gt.s32.totalorder %v1367, 0
    %v1369 = vsel %vm1368, %v1367, 0
    %v1370 = vshrl.u32 %v1369, 5
    %v1371 = vand.u32 %v1369, 31
    %v1372 = vsub.s32 32, %v1371
    %v1373 = vshrl.u32 683565275, %v1372
    %v1374 = vshll.u32 683565275, %v1371
    %v1375 = vshrl.u32 2475754826, %v1372
    %v1376 = vor.u32 %v1374, %v1375
    %v1377 = vshll.u32 2475754826, %v1371
    %v1378 = vshrl.u32 2131351028, %v1372
    %v1379 = vor.u32 %v1377, %v1378
    %v1380 = vshll.u32 2131351028, %v1371
    %v1381 = vshrl.u32 2102212464, %v1372
    %v1382 = vor.u32 %v1380, %v1381
    %v1383 = vshll.u32 2102212464, %v1371
    %v1384 = vshrl.u32 920167782, %v1372
    %v1385 = vor.u32 %v1383, %v1384
    %v1386 = vshll.u32 920167782, %v1371
    %v1387 = vshrl.u32 1326507024, %v1372
    %v1388 = vor.u32 %v1386, %v1387
    %vm1389 = vcmp.lt.s32.totalorder %v1370, 1
    %vm1390 = vcmp.lt.s32.totalorder %v1370, 2
    %vm1391 = vcmp.lt.s32.totalorder %v1370, 3
    %vm1392 = vcmp.lt.s32.totalorder %v1370, 4
    %v1393 = vsel %vm1389, %v1373, %v1376
    %v1394 = vsel %vm1392, %v1382, 2102212464
    %v1395 = vsel %vm1391, %v1379, %v1394
    %v1396 = vsel %vm1390, %v1393, %v1395
    %v1397 = vsel %vm1389, %v1376, %v1379
    %v1398 = vsel %vm1392, %v1385, 920167782
    %v1399 = vsel %vm1391, %v1382, %v1398
    %v1400 = vsel %vm1390, %v1397, %v1399
    %v1401 = vsel %vm1389, %v1379, %v1382
    %v1402 = vsel %vm1392, %v1388, 1326507024
    %v1403 = vsel %vm1391, %v1385, %v1402
    %v1404 = vsel %vm1390, %v1401, %v1403
    %v1405 = vshll.u32 %v1365, 8
    %v1406 = vmul.u32.u64.compose %v1405, %v1404
    %v1407 = vextract.low.u32 %v1406
    %v1408 = vextract.high.u32 %v1406
    %v1409 = vmul.u32.u64.compose %v1405, %v1400
    %v1410 = vextract.low.u32 %v1409
    %v1411 = vextract.high.u32 %v1409
    %v1412 = vmul.u32 %v1405, %v1396
    %v1413 = vadd.s32 %v1408, %v1410
    %vm1414 = vc.u32 %v1408, %v1410
    %v1415 = vadd.s32 %v1411, 1
    %v1416 = vsel %vm1414, %v1415, %v1411
    %v1417 = vadd.s32 %v1412, %v1416
    %v1418 = vadd.s32 %v1417, 536870912
    %v1419 = vshrl.u32 %v1418, 30
    %v1420 = vshll.u32 %v1419, 30
    %v1421 = vsub.s32 %v1417, %v1420
    %vm1422 = vcmp.lt.s32.totalorder %v1421, 0
    %v1423 = vsub.s32 0, %v1421
    %v1424 = vsel %vm1422, %v1423, %v1421
    %v1425 = vclz %v1424
    %v1426 = vsub.s32 %v1425, 2
    %vm1427 = vcmp.gt.s32.totalorder 0, %v1426
    %v1428 = vsel %vm1427, 0, %v1426
    %v1429 = vsub.s32 32, %v1428
    %v1430 = vshll.u32 %v1421, %v1428
    %v1431 = vshrl.u32 %v1413, %v1429
    %v1432 = vor.u32 %v1430, %v1431
    %v1433 = vsub.s32 4294967266, %v1428
    %v1434 = vadd.s32 %v1433, 127
    %v1435 = vshll.u32 %v1434, 23
    %v1436 = vor.u32 4788187, %v1435
    %v1437 = vand.u32 2147483647, %v1436
    %v1439 = vcvt.s32.f32 %v1432
    %v1440 = vmul.f32 %v1439, %v1437
    %v1441 = vxor.u32 %v1440, 2147483648
    %v1442 = vsel %vm1359, %v1441, %v1440
    %v1443 = vsub.s32 4, %v1419
    %v1444 = vsel %vm1359, %v1443, %v1419
    %v1445 = vsel %vm1358, %v117, %v1442
    %v1446 = vsel %vm1358, 0, %v1444
    %v1447 = vcosq.f32.pop %v1445
    %v1448 = vsinq.f32.pop %v1445
    %vm1449 = vweird.f32 %v117
    %v1450 = vand.u32 %v1446, 3
    %vm1451 = vcmp.lt.s32.totalorder %v1450, 2
    %vm1452 = vcmp.eq.s32.totalorder %v1450, 0
    %v1453 = vxor.u32 %v1448, 2147483648
    %v1454 = vsel %vm1452, %v1447, %v1453
    %vm1455 = vcmp.eq.s32.totalorder %v1450, 2
    %v1456 = vxor.u32 %v1447, 2147483648
    %v1457 = vsel %vm1455, %v1456, %v1448
    %v1458 = vsel %vm1451, %v1454, %v1457
    %v1459 = vsel %vm1449, nan, %v1458
    %v1460 = vand.u32 2147483647, %v118
    %vm1461 = vcmp.le.f32.partialorder %v1460, 0.7853982
    %vm1462 = vcmp.lt.s32.totalorder %v118, 0
    %v1463 = vand.u32 %v118, 2139095040
    %v1464 = vshrl.u32 %v1463, 23
    %v1465 = vsub.s32 %v1464, 127
    %v1466 = vand.u32 2147483647, %v118
    %v1467 = vand.u32 %v1466, 8388607
    %v1468 = vor.u32 %v1467, 8388608
    %v1469 = vsub.s32 0, %v1468
    %v1470 = vadd.s32 %v1465, 1
    %vm1471 = vcmp.gt.s32.totalorder %v1470, 0
    %v1472 = vsel %vm1471, %v1470, 0
    %v1473 = vshrl.u32 %v1472, 5
    %v1474 = vand.u32 %v1472, 31
    %v1475 = vsub.s32 32, %v1474
    %v1476 = vshrl.u32 683565275, %v1475
    %v1477 = vshll.u32 683565275, %v1474
    %v1478 = vshrl.u32 2475754826, %v1475
    %v1479 = vor.u32 %v1477, %v1478
    %v1480 = vshll.u32 2475754826, %v1474
    %v1481 = vshrl.u32 2131351028, %v1475
    %v1482 = vor.u32 %v1480, %v1481
    %v1483 = vshll.u32 2131351028, %v1474
    %v1484 = vshrl.u32 2102212464, %v1475
    %v1485 = vor.u32 %v1483, %v1484
    %v1486 = vshll.u32 2102212464, %v1474
    %v1487 = vshrl.u32 920167782, %v1475
    %v1488 = vor.u32 %v1486, %v1487
    %v1489 = vshll.u32 920167782, %v1474
    %v1490 = vshrl.u32 1326507024, %v1475
    %v1491 = vor.u32 %v1489, %v1490
    %vm1492 = vcmp.lt.s32.totalorder %v1473, 1
    %vm1493 = vcmp.lt.s32.totalorder %v1473, 2
    %vm1494 = vcmp.lt.s32.totalorder %v1473, 3
    %vm1495 = vcmp.lt.s32.totalorder %v1473, 4
    %v1496 = vsel %vm1492, %v1476, %v1479
    %v1497 = vsel %vm1495, %v1485, 2102212464
    %v1498 = vsel %vm1494, %v1482, %v1497
    %v1499 = vsel %vm1493, %v1496, %v1498
    %v1500 = vsel %vm1492, %v1479, %v1482
    %v1501 = vsel %vm1495, %v1488, 920167782
    %v1502 = vsel %vm1494, %v1485, %v1501
    %v1503 = vsel %vm1493, %v1500, %v1502
    %v1504 = vsel %vm1492, %v1482, %v1485
    %v1505 = vsel %vm1495, %v1491, 1326507024
    %v1506 = vsel %vm1494, %v1488, %v1505
    %v1507 = vsel %vm1493, %v1504, %v1506
    %v1508 = vshll.u32 %v1468, 8
    %v1509 = vmul.u32.u64.compose %v1508, %v1507
    %v1510 = vextract.low.u32 %v1509
    %v1511 = vextract.high.u32 %v1509
    %v1512 = vmul.u32.u64.compose %v1508, %v1503
    %v1513 = vextract.low.u32 %v1512
    %v1514 = vextract.high.u32 %v1512
    %v1515 = vmul.u32 %v1508, %v1499
    %v1516 = vadd.s32 %v1511, %v1513
    %vm1517 = vc.u32 %v1511, %v1513
    %v1518 = vadd.s32 %v1514, 1
    %v1519 = vsel %vm1517, %v1518, %v1514
    %v1520 = vadd.s32 %v1515, %v1519
    %v1521 = vadd.s32 %v1520, 536870912
    %v1522 = vshrl.u32 %v1521, 30
    %v1523 = vshll.u32 %v1522, 30
    %v1524 = vsub.s32 %v1520, %v1523
    %vm1525 = vcmp.lt.s32.totalorder %v1524, 0
    %v1526 = vsub.s32 0, %v1524
    %v1527 = vsel %vm1525, %v1526, %v1524
    %v1528 = vclz %v1527
    %v1529 = vsub.s32 %v1528, 2
    %vm1530 = vcmp.gt.s32.totalorder 0, %v1529
    %v1531 = vsel %vm1530, 0, %v1529
    %v1532 = vsub.s32 32, %v1531
    %v1533 = vshll.u32 %v1524, %v1531
    %v1534 = vshrl.u32 %v1516, %v1532
    %v1535 = vor.u32 %v1533, %v1534
    %v1536 = vsub.s32 4294967266, %v1531
    %v1537 = vadd.s32 %v1536, 127
    %v1538 = vshll.u32 %v1537, 23
    %v1539 = vor.u32 4788187, %v1538
    %v1540 = vand.u32 2147483647, %v1539
    %v1542 = vcvt.s32.f32 %v1535
    %v1543 = vmul.f32 %v1542, %v1540
    %v1544 = vxor.u32 %v1543, 2147483648
    %v1545 = vsel %vm1462, %v1544, %v1543
    %v1546 = vsub.s32 4, %v1522
    %v1547 = vsel %vm1462, %v1546, %v1522
    %v1548 = vsel %vm1461, %v118, %v1545
    %v1549 = vsel %vm1461, 0, %v1547
    %v1550 = vcosq.f32.pop %v1548
    %v1551 = vsinq.f32.pop %v1548
    %vm1552 = vweird.f32 %v118
    %v1553 = vand.u32 %v1549, 3
    %vm1554 = vcmp.lt.s32.totalorder %v1553, 2
    %vm1555 = vcmp.eq.s32.totalorder %v1553, 0
    %v1556 = vxor.u32 %v1551, 2147483648
    %v1557 = vsel %vm1555, %v1550, %v1556
    %vm1558 = vcmp.eq.s32.totalorder %v1553, 2
    %v1559 = vxor.u32 %v1550, 2147483648
    %v1560 = vsel %vm1558, %v1559, %v1551
    %v1561 = vsel %vm1554, %v1557, %v1560
    %v1562 = vsel %vm1552, nan, %v1561
    %v1563 = vand.u32 2147483647, %v119
    %vm1564 = vcmp.le.f32.partialorder %v1563, 0.7853982
    %vm1565 = vcmp.lt.s32.totalorder %v119, 0
    %v1566 = vand.u32 %v119, 2139095040
    %v1567 = vshrl.u32 %v1566, 23
    %v1568 = vsub.s32 %v1567, 127
    %v1569 = vand.u32 2147483647, %v119
    %v1570 = vand.u32 %v1569, 8388607
    %v1571 = vor.u32 %v1570, 8388608
    %v1572 = vsub.s32 0, %v1571
    %v1573 = vadd.s32 %v1568, 1
    %vm1574 = vcmp.gt.s32.totalorder %v1573, 0
    %v1575 = vsel %vm1574, %v1573, 0
    %v1576 = vshrl.u32 %v1575, 5
    %v1577 = vand.u32 %v1575, 31
    %v1578 = vsub.s32 32, %v1577
    %v1579 = vshrl.u32 683565275, %v1578
    %v1580 = vshll.u32 683565275, %v1577
    %v1581 = vshrl.u32 2475754826, %v1578
    %v1582 = vor.u32 %v1580, %v1581
    %v1583 = vshll.u32 2475754826, %v1577
    %v1584 = vshrl.u32 2131351028, %v1578
    %v1585 = vor.u32 %v1583, %v1584
    %v1586 = vshll.u32 2131351028, %v1577
    %v1587 = vshrl.u32 2102212464, %v1578
    %v1588 = vor.u32 %v1586, %v1587
    %v1589 = vshll.u32 2102212464, %v1577
    %v1590 = vshrl.u32 920167782, %v1578
    %v1591 = vor.u32 %v1589, %v1590
    %v1592 = vshll.u32 920167782, %v1577
    %v1593 = vshrl.u32 1326507024, %v1578
    %v1594 = vor.u32 %v1592, %v1593
    %vm1595 = vcmp.lt.s32.totalorder %v1576, 1
    %vm1596 = vcmp.lt.s32.totalorder %v1576, 2
    %vm1597 = vcmp.lt.s32.totalorder %v1576, 3
    %vm1598 = vcmp.lt.s32.totalorder %v1576, 4
    %v1599 = vsel %vm1595, %v1579, %v1582
    %v1600 = vsel %vm1598, %v1588, 2102212464
    %v1601 = vsel %vm1597, %v1585, %v1600
    %v1602 = vsel %vm1596, %v1599, %v1601
    %v1603 = vsel %vm1595, %v1582, %v1585
    %v1604 = vsel %vm1598, %v1591, 920167782
    %v1605 = vsel %vm1597, %v1588, %v1604
    %v1606 = vsel %vm1596, %v1603, %v1605
    %v1607 = vsel %vm1595, %v1585, %v1588
    %v1608 = vsel %vm1598, %v1594, 1326507024
    %v1609 = vsel %vm1597, %v1591, %v1608
    %v1610 = vsel %vm1596, %v1607, %v1609
    %v1611 = vshll.u32 %v1571, 8
    %v1612 = vmul.u32.u64.compose %v1611, %v1610
    %v1613 = vextract.low.u32 %v1612
    %v1614 = vextract.high.u32 %v1612
    %v1615 = vmul.u32.u64.compose %v1611, %v1606
    %v1616 = vextract.low.u32 %v1615
    %v1617 = vextract.high.u32 %v1615
    %v1618 = vmul.u32 %v1611, %v1602
    %v1619 = vadd.s32 %v1614, %v1616
    %vm1620 = vc.u32 %v1614, %v1616
    %v1621 = vadd.s32 %v1617, 1
    %v1622 = vsel %vm1620, %v1621, %v1617
    %v1623 = vadd.s32 %v1618, %v1622
    %v1624 = vadd.s32 %v1623, 536870912
    %v1625 = vshrl.u32 %v1624, 30
    %v1626 = vshll.u32 %v1625, 30
    %v1627 = vsub.s32 %v1623, %v1626
    %vm1628 = vcmp.lt.s32.totalorder %v1627, 0
    %v1629 = vsub.s32 0, %v1627
    %v1630 = vsel %vm1628, %v1629, %v1627
    %v1631 = vclz %v1630
    %v1632 = vsub.s32 %v1631, 2
    %vm1633 = vcmp.gt.s32.totalorder 0, %v1632
    %v1634 = vsel %vm1633, 0, %v1632
    %v1635 = vsub.s32 32, %v1634
    %v1636 = vshll.u32 %v1627, %v1634
    %v1637 = vshrl.u32 %v1619, %v1635
    %v1638 = vor.u32 %v1636, %v1637
    %v1639 = vsub.s32 4294967266, %v1634
    %v1640 = vadd.s32 %v1639, 127
    %v1641 = vshll.u32 %v1640, 23
    %v1642 = vor.u32 4788187, %v1641
    %v1643 = vand.u32 2147483647, %v1642
    %v1645 = vcvt.s32.f32 %v1638
    %v1646 = vmul.f32 %v1645, %v1643
    %v1647 = vxor.u32 %v1646, 2147483648
    %v1648 = vsel %vm1565, %v1647, %v1646
    %v1649 = vsub.s32 4, %v1625
    %v1650 = vsel %vm1565, %v1649, %v1625
    %v1651 = vsel %vm1564, %v119, %v1648
    %v1652 = vsel %vm1564, 0, %v1650
    %v1653 = vcosq.f32.pop %v1651
    %v1654 = vsinq.f32.pop %v1651
    %vm1655 = vweird.f32 %v119
    %v1656 = vand.u32 %v1652, 3
    %vm1657 = vcmp.lt.s32.totalorder %v1656, 2
    %vm1658 = vcmp.eq.s32.totalorder %v1656, 0
    %v1659 = vxor.u32 %v1654, 2147483648
    %v1660 = vsel %vm1658, %v1653, %v1659
    %vm1661 = vcmp.eq.s32.totalorder %v1656, 2
    %v1662 = vxor.u32 %v1653, 2147483648
    %v1663 = vsel %vm1661, %v1662, %v1654
    %v1664 = vsel %vm1657, %v1660, %v1663
    %v1665 = vsel %vm1655, nan, %v1664
    %v1666 = vand.u32 2147483647, %v120
    %vm1667 = vcmp.le.f32.partialorder %v1666, 0.7853982
    %vm1668 = vcmp.lt.s32.totalorder %v120, 0
    %v1669 = vand.u32 %v120, 2139095040
    %v1670 = vshrl.u32 %v1669, 23
    %v1671 = vsub.s32 %v1670, 127
    %v1672 = vand.u32 2147483647, %v120
    %v1673 = vand.u32 %v1672, 8388607
    %v1674 = vor.u32 %v1673, 8388608
    %v1675 = vsub.s32 0, %v1674
    %v1676 = vadd.s32 %v1671, 1
    %vm1677 = vcmp.gt.s32.totalorder %v1676, 0
    %v1678 = vsel %vm1677, %v1676, 0
    %v1679 = vshrl.u32 %v1678, 5
    %v1680 = vand.u32 %v1678, 31
    %v1681 = vsub.s32 32, %v1680
    %v1682 = vshrl.u32 683565275, %v1681
    %v1683 = vshll.u32 683565275, %v1680
    %v1684 = vshrl.u32 2475754826, %v1681
    %v1685 = vor.u32 %v1683, %v1684
    %v1686 = vshll.u32 2475754826, %v1680
    %v1687 = vshrl.u32 2131351028, %v1681
    %v1688 = vor.u32 %v1686, %v1687
    %v1689 = vshll.u32 2131351028, %v1680
    %v1690 = vshrl.u32 2102212464, %v1681
    %v1691 = vor.u32 %v1689, %v1690
    %v1692 = vshll.u32 2102212464, %v1680
    %v1693 = vshrl.u32 920167782, %v1681
    %v1694 = vor.u32 %v1692, %v1693
    %v1695 = vshll.u32 920167782, %v1680
    %v1696 = vshrl.u32 1326507024, %v1681
    %v1697 = vor.u32 %v1695, %v1696
    %vm1698 = vcmp.lt.s32.totalorder %v1679, 1
    %vm1699 = vcmp.lt.s32.totalorder %v1679, 2
    %vm1700 = vcmp.lt.s32.totalorder %v1679, 3
    %vm1701 = vcmp.lt.s32.totalorder %v1679, 4
    %v1702 = vsel %vm1698, %v1682, %v1685
    %v1703 = vsel %vm1701, %v1691, 2102212464
    %v1704 = vsel %vm1700, %v1688, %v1703
    %v1705 = vsel %vm1699, %v1702, %v1704
    %v1706 = vsel %vm1698, %v1685, %v1688
    %v1707 = vsel %vm1701, %v1694, 920167782
    %v1708 = vsel %vm1700, %v1691, %v1707
    %v1709 = vsel %vm1699, %v1706, %v1708
    %v1710 = vsel %vm1698, %v1688, %v1691
    %v1711 = vsel %vm1701, %v1697, 1326507024
    %v1712 = vsel %vm1700, %v1694, %v1711
    %v1713 = vsel %vm1699, %v1710, %v1712
    %v1714 = vshll.u32 %v1674, 8
    %v1715 = vmul.u32.u64.compose %v1714, %v1713
    %v1716 = vextract.low.u32 %v1715
    %v1717 = vextract.high.u32 %v1715
    %v1718 = vmul.u32.u64.compose %v1714, %v1709
    %v1719 = vextract.low.u32 %v1718
    %v1720 = vextract.high.u32 %v1718
    %v1721 = vmul.u32 %v1714, %v1705
    %v1722 = vadd.s32 %v1717, %v1719
    %vm1723 = vc.u32 %v1717, %v1719
    %v1724 = vadd.s32 %v1720, 1
    %v1725 = vsel %vm1723, %v1724, %v1720
    %v1726 = vadd.s32 %v1721, %v1725
    %v1727 = vadd.s32 %v1726, 536870912
    %v1728 = vshrl.u32 %v1727, 30
    %v1729 = vshll.u32 %v1728, 30
    %v1730 = vsub.s32 %v1726, %v1729
    %vm1731 = vcmp.lt.s32.totalorder %v1730, 0
    %v1732 = vsub.s32 0, %v1730
    %v1733 = vsel %vm1731, %v1732, %v1730
    %v1734 = vclz %v1733
    %v1735 = vsub.s32 %v1734, 2
    %vm1736 = vcmp.gt.s32.totalorder 0, %v1735
    %v1737 = vsel %vm1736, 0, %v1735
    %v1738 = vsub.s32 32, %v1737
    %v1739 = vshll.u32 %v1730, %v1737
    %v1740 = vshrl.u32 %v1722, %v1738
    %v1741 = vor.u32 %v1739, %v1740
    %v1742 = vsub.s32 4294967266, %v1737
    %v1743 = vadd.s32 %v1742, 127
    %v1744 = vshll.u32 %v1743, 23
    %v1745 = vor.u32 4788187, %v1744
    %v1746 = vand.u32 2147483647, %v1745
    %v1748 = vcvt.s32.f32 %v1741
    %v1749 = vmul.f32 %v1748, %v1746
    %v1750 = vxor.u32 %v1749, 2147483648
    %v1751 = vsel %vm1668, %v1750, %v1749
    %v1752 = vsub.s32 4, %v1728
    %v1753 = vsel %vm1668, %v1752, %v1728
    %v1754 = vsel %vm1667, %v120, %v1751
    %v1755 = vsel %vm1667, 0, %v1753
    %v1756 = vcosq.f32.pop %v1754
    %v1757 = vsinq.f32.pop %v1754
    %vm1758 = vweird.f32 %v120
    %v1759 = vand.u32 %v1755, 3
    %vm1760 = vcmp.lt.s32.totalorder %v1759, 2
    %vm1761 = vcmp.eq.s32.totalorder %v1759, 0
    %v1762 = vxor.u32 %v1757, 2147483648
    %v1763 = vsel %vm1761, %v1756, %v1762
    %vm1764 = vcmp.eq.s32.totalorder %v1759, 2
    %v1765 = vxor.u32 %v1756, 2147483648
    %v1766 = vsel %vm1764, %v1765, %v1757
    %v1767 = vsel %vm1760, %v1763, %v1766
    %v1768 = vsel %vm1758, nan, %v1767
    %1769 = vst [vmem:[#allocation5] sm:$0xff] %v223
    %1770 = vst [vmem:[#allocation5 + $0x8] sm:$0xff] %v326
    %1771 = vst [vmem:[#allocation5 + $0x10] sm:$0xff] %v429
    %1772 = vst [vmem:[#allocation5 + $0x18] sm:$0xff] %v532
    %1773 = vst [vmem:[#allocation5 + $0x20] sm:$0xff] %v635
    %1774 = vst [vmem:[#allocation5 + $0x28] sm:$0xff] %v738
    %1775 = vst [vmem:[#allocation5 + $0x30] sm:$0xff] %v841
    %1776 = vst [vmem:[#allocation5 + $0x38] sm:$0xff] %v944
    %1777 = vst [vmem:[#allocation5 + $0x40] sm:$0xff] %v1047
    %1778 = vst [vmem:[#allocation5 + $0x48] sm:$0xff] %v1150
    %1779 = vst [vmem:[#allocation5 + $0x50] sm:$0xff] %v1253
    %1780 = vst [vmem:[#allocation5 + $0x58] sm:$0xff] %v1356
    %1781 = vst [vmem:[#allocation5 + $0x60] sm:$0xff] %v1459
    %1782 = vst [vmem:[#allocation5 + $0x68] sm:$0xff] %v1562
    %1783 = vst [vmem:[#allocation5 + $0x70] sm:$0xff] %v1665
    %1784 = vst [vmem:[#allocation5 + $0x78] sm:$0xff] %v1768
    // Predicated region
    $region14: #{tpu_custom_call.1} parent=1 // pred_check
      _
    $region15: #{tpu_custom_call.1} parent=1 // pred_check_branch
      %1786 = sbr.rel (0) target = $region17
    $region16: #{tpu_custom_call.1} parent=1 // pred_region
      %s1788 = ssub.s32 2048, 2048
      %1789 = vsyncadd [#allocation4], %s1788
      %s1790 = sshll.u32 [#allocation5], 4
      %s1791 = int_to_ptr.vmem [resolvable:$true] %s1790
      %1796 = dma.vmem_to_hbm [thread:$0]  %s1791, 2048, %s2, [#allocation4], 128, 128, 8
    $region17: #{tpu_custom_call.1} parent=1 // pred_fallthru
      _
    // Predicated region
    $region18: #{tpu_custom_call.1} parent=1 // pred_check
      _
    $region19: #{tpu_custom_call.1} parent=1 // pred_check_branch
      %1798 = sbr.rel (0) target = $region21
    $region20: #{tpu_custom_call.1} parent=1 // pred_region
      %1799 = dma.done [#allocation4], 2048
    $region21: #{tpu_custom_call.1} parent=1 // pred_fallthru
      _
    %1800 = vsyncpa [#allocation3], 1
    %1801 = vsyncpa [#allocation4], 1

</llo_original>
